<compile_context>
chip_gen: v7x
topology: tpu7x:2x2x1
jax: 0.10.0
libtpu: 0.0.40
codegen_flags: <defaults>
</compile_context>

<pallas_src>
import math

import jax
import jax.numpy as jnp
from jax.experimental import pallas as pl
from jax.experimental.pallas import tpu as pltpu

LANES = 128
_BN_EPS = 1e-5


# ----------------------------------------------------------------------------
# Fused kernel: each grid step k =
#   HGATLayer(transfer=False, bias=False, concat=True, use_edge=True)
#   + BatchNorm1d (batch statistics) on node & edge embeddings
#   + Fusion(current_node_embedding, sub_node_embedding)
# with the current node embedding carried in VMEM scratch across steps.
# ----------------------------------------------------------------------------
def _hgnn_kernel(e_valid_ref,                      # SMEM (K,) int32: valid edges per step
                 x_ref, adj_t_ref, w2_ref, w3_ref, gamma_ref, beta_ref,
                 fw1t_ref, fb1_ref, fw2_ref, fb2_ref,
                 node_out_ref, edge_out_ref, cur_ref):
    k = pl.program_id(0)

    @pl.when(k == 0)
    def _():
        cur_ref[...] = x_ref[...]                  # init carry from friendship emb

    x = cur_ref[...]                               # (N, Dp) f32 current node embedding
    adj_t = adj_t_ref[...].astype(jnp.float32)     # (Ep, N)  bf16 in HBM -> f32 math
    e_valid = e_valid_ref[k]                       # int32 scalar (valid hyperedges)

    ep, n_nodes = adj_t.shape

    # mask of real (non-padded) hyperedge rows
    edge_mask = jax.lax.broadcasted_iota(jnp.int32, (ep, n_nodes), 0) < e_valid

    # --- shared exp for both softmaxes (exact: softmax is shift-invariant) ---
    # pad fill is 0.0 and adjacency values are bounded, so a single global max
    # keeps exp() in range; padded rows are zeroed explicitly.
    gmax = jnp.max(adj_t)
    exp_all = jnp.where(edge_mask, jnp.exp(adj_t - gmax), 0.0)          # (Ep, N)

    # softmax(adj.T, dim=1): normalize along the node (lane) axis
    row_sum = jnp.sum(exp_all, axis=1, keepdims=True)                   # (Ep, 1)
    at_soft = exp_all * pl.reciprocal(row_sum, approx=True)
    at_soft = jnp.where(edge_mask, at_soft, 0.0)                        # kill 0/0 on pad rows

    # softmax(adj, dim=1) (stored transposed): normalize along the edge axis
    col_sum = jnp.sum(exp_all, axis=0, keepdims=True)                   # (1, N)
    a_soft_t = exp_all * pl.reciprocal(col_sum, approx=True)            # pad rows exactly 0

    # ---- HGATLayer (transfer=False -> weight2, no bias) ---------------------
    x_bf = x.astype(jnp.bfloat16)
    xw = jnp.dot(x_bf, w2_ref[...], preferred_element_type=jnp.float32)  # (N, Dp)

    at_soft_bf = at_soft.astype(jnp.bfloat16)
    edge_emb = jnp.dot(at_soft_bf, xw.astype(jnp.bfloat16),
                       preferred_element_type=jnp.float32)               # (Ep, Dp)
    # TODO(synk): F.dropout on edge_embeddings omitted (eval-mode identity).
    edge_emb = jnp.maximum(edge_emb, 0.0)

    edge_trans = jnp.dot(edge_emb.astype(jnp.bfloat16), w3_ref[...],
                         preferred_element_type=jnp.float32)             # (Ep, Dp)

    # node_att[n, d] = sum_e softmax(adj,1)[n, e] * edge_trans[e, d]
    node_att = jax.lax.dot_general(
        a_soft_t.astype(jnp.bfloat16), edge_trans.astype(jnp.bfloat16),
        dimension_numbers=(((0,), (0,)), ((), ())),
        preferred_element_type=jnp.float32)                              # (N, Dp)
    node_att = jnp.maximum(node_att, 0.0)                                # concat=True

    edge_out = jnp.dot(at_soft_bf, node_att.astype(jnp.bfloat16),
                       preferred_element_type=jnp.float32)               # (Ep, Dp)
    edge_out = jnp.maximum(edge_out, 0.0)

    # ---- BatchNorm1d (training-mode batch stats, one-pass variance) --------
    gamma = gamma_ref[...]
    beta = beta_ref[...]

    def bn(v, count_f32):
        inv_n = 1.0 / count_f32
        mean = jnp.sum(v, axis=0, keepdims=True) * inv_n
        mean_sq = jnp.sum(v * v, axis=0, keepdims=True) * inv_n
        var = jnp.maximum(mean_sq - mean * mean, 0.0)
        return (v - mean) * jax.lax.rsqrt(var + _BN_EPS) * gamma + beta

    node_bn = bn(node_att, float(n_nodes))                 # sub_node_embedding
    edge_bn = bn(edge_out, e_valid.astype(jnp.float32))    # sub_edge_embedding
    # (padded edge rows are exactly 0 pre-BN, so sums over all rows == sums
    #  over valid rows; padded BN rows are garbage but sliced off outside.)

    # ---- Fusion(current, sub_node_embedding): two matmuls, no concat --------
    fw1t = fw1t_ref[...]
    fb1 = fb1_ref[...]
    fw2 = fw2_ref[...]
    fb2 = fb2_ref[...]

    h0 = jnp.tanh(jnp.dot(x_bf, fw1t, preferred_element_type=jnp.float32) + fb1)
    h1 = jnp.tanh(jnp.dot(node_bn.astype(jnp.bfloat16), fw1t,
                          preferred_element_type=jnp.float32) + fb1)
    s0 = jnp.sum(h0 * fw2, axis=1, keepdims=True) + fb2                  # (N, 1)
    s1 = jnp.sum(h1 * fw2, axis=1, keepdims=True) + fb2
    m = jnp.maximum(s0, s1)
    e0 = jnp.exp(s0 - m)
    e1 = jnp.exp(s1 - m)
    denom = e0 + e1                                                      # exact gate
    a0 = e0 / denom
    a1 = e1 / denom
    # TODO(synk): Fusion dropout on emb_score omitted (eval-mode identity).

    new_cur = a0 * x + a1 * node_bn
    cur_ref[...] = new_cur                                 # carry into next step
    node_out_ref[...] = new_cur.astype(node_out_ref.dtype)
    edge_out_ref[...] = edge_bn.astype(edge_out_ref.dtype)


# ----------------------------------------------------------------------------
# Wrapper: lane padding, adjacency transpose/pad/bf16, single gridded call
# ----------------------------------------------------------------------------
def _pad_last(a, target):
    pad = target - a.shape[-1]
    return a if pad == 0 else jnp.pad(a, [(0, 0)] * (a.ndim - 1) + [(0, pad)])


def _pad_square(a, target):
    pad = target - a.shape[-1]
    return a if pad == 0 else jnp.pad(a, [(0, pad), (0, pad)])


def hgnn_steps(x, adj_list, params, out_dtype=jnp.float32):
    """Run all K subgraph iterations inside one Pallas kernel (grid=(K,)).

    adj_list: list of (N, E_k) adjacency matrices (E_k may differ per step).
    Returns (node_out (K, N, D), [edge_out_k (E_k, D)]).
    out_dtype: set to jnp.bfloat16 on store-bandwidth-bound v5e if the
    consumer tolerates it; default float32 preserves module semantics.
    """
    N, D = x.shape
    K = len(adj_list)
    Dp = max(LANES, pl.cdiv(D, LANES) * LANES)               # lane-dense feature dim
    e_sizes = [int(a.shape[1]) for a in adj_list]
    Ep = max(8, ((max(e_sizes) + 7) // 8) * 8)                # sublane-padded edge dim

    # adjacency: transpose so the node axis is lane-dense, zero-pad ragged E
    # (masked in-kernel via e_valid), store bf16 — it is the only per-step DMA.
    adj_t = jnp.stack([
        jnp.pad(jnp.asarray(a, jnp.float32).T, ((0, Ep - a.shape[1]), (0, 0)))
        for a in adj_list], axis=0).astype(jnp.bfloat16)      # (K, Ep, N)
    e_valid = jnp.asarray(e_sizes, dtype=jnp.int32)           # (K,) scalar-prefetched

    xp = _pad_last(x, Dp).astype(jnp.float32)
    w2 = _pad_square(params["w2"], Dp).astype(jnp.bfloat16)
    w3 = _pad_square(params["w3"], Dp).astype(jnp.bfloat16)
    fw1t = _pad_square(params["fw1t"], Dp).astype(jnp.bfloat16)
    fw2 = _pad_last(params["fw2"], Dp).astype(jnp.float32)
    fb1 = _pad_last(params["fb1"], Dp).astype(jnp.float32)
    gamma = _pad_last(params["gamma"], Dp).astype(jnp.float32)
    beta = _pad_last(params["beta"], Dp).astype(jnp.float32)
    fb2 = params["fb2"].astype(jnp.float32)

    # constant-index blocks (loaded once, resident across the whole grid)
    rep = lambda shape: pl.BlockSpec(shape, lambda k, ev: (0, 0))

    node_out, edge_out = pl.pallas_call(
        _hgnn_kernel,
        out_shape=(jax.ShapeDtypeStruct((K, N, Dp), out_dtype),
                   jax.ShapeDtypeStruct((K, Ep, Dp), out_dtype)),
        grid_spec=pltpu.PrefetchScalarGridSpec(
            num_scalar_prefetch=1,                             # e_valid -> SMEM
            grid=(K,),
            in_specs=[
                rep((N, Dp)),                                        # x (initial carry)
                pl.BlockSpec((None, Ep, N), lambda k, ev: (k, 0, 0)),  # adj_t of step k
                rep((Dp, Dp)),                                       # w2 (bf16)
                rep((Dp, Dp)),                                       # w3 (bf16)
                rep((1, Dp)),                                        # gamma
                rep((1, Dp)),                                        # beta
                rep((Dp, Dp)),                                       # fw1t (bf16)
                rep((1, Dp)),                                        # fb1
                rep((1, Dp)),                                        # fw2 row
                rep((1, 1)),                                         # fb2
            ],
            out_specs=(
                pl.BlockSpec((None, N, Dp), lambda k, ev: (k, 0, 0)),
                pl.BlockSpec((None, Ep, Dp), lambda k, ev: (k, 0, 0)),
            ),
            scratch_shapes=[pltpu.VMEM((N, Dp), jnp.float32)],       # carried embedding
        ),
        compiler_params=pltpu.CompilerParams(
            dimension_semantics=("arbitrary",),                      # sequential carry
            vmem_limit_bytes=40 * 1024 * 1024),                      # v7x 64 MiB headroom
    )(e_valid, xp, adj_t, w2, w3, gamma, beta, fw1t, fb1, fw2, fb2)

    node_out = node_out[:, :, :D]
    edge_list = [edge_out[i, :e_sizes[i], :D] for i in range(K)]
    return node_out, edge_list


# ----------------------------------------------------------------------------
# Full module forward
# ----------------------------------------------------------------------------
def hierarchical_gnn_forward(friendship_embedding, hypergraph_structure, params):
    hypergraph, root_indices = hypergraph_structure
    # F.embedding(root_indices, friendship_embedding) is computed by the
    # reference but never consumed by HGATLayer -> dead gather removed.
    del root_indices

    keys = sorted(hypergraph.keys())
    adj_list = [hypergraph[k] for k in keys]
    node_out, edge_list = hgnn_steps(friendship_embedding, adj_list, params)
    return {k: [node_out[i], edge_list[i]] for i, k in enumerate(keys)}


# ----------------------------------------------------------------------------
# Deterministic parameter init (mirrors the PyTorch __init__ shapes / inits)
# ----------------------------------------------------------------------------
def init_params(key, dim):
    stdv = 1.0 / math.sqrt(dim)
    k = jax.random.split(key, 6)
    # HGATLayer: weight2, weight3 ~ U(-stdv, stdv)
    w2 = jax.random.uniform(k[0], (dim, dim), jnp.float32, -stdv, stdv)
    w3 = jax.random.uniform(k[1], (dim, dim), jnp.float32, -stdv, stdv)
    # Fusion.linear1: xavier_normal_ weight (dim, dim); default bias init
    xav1 = math.sqrt(2.0 / (dim + dim))
    fw1 = jax.random.normal(k[2], (dim, dim), jnp.float32) * xav1
    fb1 = jax.random.uniform(k[3], (1, dim), jnp.float32, -stdv, stdv)
    # Fusion.linear2: xavier_normal_ weight (1, dim); default bias init
    xav2 = math.sqrt(2.0 / (dim + 1))
    fw2 = jax.random.normal(k[4], (1, dim), jnp.float32) * xav2
    fb2 = jax.random.uniform(k[5], (1, 1), jnp.float32, -stdv, stdv)
    # BatchNorm1d(output_dim): gamma=1, beta=0
    gamma = jnp.ones((1, dim), jnp.float32)
    beta = jnp.zeros((1, dim), jnp.float32)
    return dict(w2=w2, w3=w3, gamma=gamma, beta=beta,
                fw1t=fw1.T, fb1=fb1, fw2=fw2, fb2=fb2)


# ----------------------------------------------------------------------------
# Pure-JAX reference (f32, exact) for sanity checking
# ----------------------------------------------------------------------------
def _reference_forward(x, hypergraph, params):
    def hgat(cur, adj):
        xw = cur @ params["w2"]
        adj_t_soft = jax.nn.softmax(adj.T, axis=1)
        edge = jnp.maximum(adj_t_soft @ xw, 0.0)
        edge_trans = edge @ params["w3"]
        adj_soft = jax.nn.softmax(adj, axis=1)
        node = jnp.maximum(adj_soft @ edge_trans, 0.0)
        edge_out = jnp.maximum(adj_t_soft @ node, 0.0)
        return node, edge_out

    def bn(v):
        mean = v.mean(0, keepdims=True)
        var = ((v - mean) ** 2).mean(0, keepdims=True)
        return (v - mean) / jnp.sqrt(var + _BN_EPS) * params["gamma"] + params["beta"]

    def fusion(hidden, dy):
        emb = jnp.stack([hidden, dy], axis=0)
        h = jnp.tanh(emb @ params["fw1t"] + params["fb1"])
        sc = jax.nn.softmax(h @ params["fw2"].T + params["fb2"], axis=0)
        return jnp.sum(sc * emb, axis=0)

    results = {}
    cur = x
    for key in sorted(hypergraph.keys()):
        node, edge = hgat(cur, hypergraph[key])
        node = bn(node)
        edge = bn(edge)
        cur = fusion(cur, node)
        results[key] = [cur, edge]
    return results


if __name__ == "__main__":
    N, D = 16, 32     # nodes, feature dim (input = hidden = output)
    key = jax.random.PRNGKey(0)
    kx, ka1, ka2, ka3, kp = jax.random.split(key, 5)

    friendship_embedding = jax.random.normal(kx, (N, D), jnp.float32)
    hypergraph = {
        "sub_0": jax.random.uniform(ka1, (N, 8), jnp.float32),
        "sub_1": jax.random.uniform(ka2, (N, 8), jnp.float32),
        "sub_2": jax.random.uniform(ka3, (N, 5), jnp.float32),  # ragged E exercises masking
    }
    root_indices = jnp.array([0, 3, 7, 11], dtype=jnp.int32)
    params = init_params(kp, D)

    results = hierarchical_gnn_forward(
        friendship_embedding, (hypergraph, root_indices), params)
    ref = _reference_forward(friendship_embedding, hypergraph, params)

    for k in sorted(results.keys()):
        node, edge = results[k]
        jax.block_until_ready(node)
        jax.block_until_ready(edge)
        rn, re_ = ref[k]
        assert node.shape == rn.shape and edge.shape == re_.shape
        assert bool(jnp.all(jnp.isfinite(node))) and bool(jnp.all(jnp.isfinite(edge)))
        # Kernel uses bf16 MXU operands, bf16-stored adjacency and approximate
        # reciprocals in the attention softmaxes; BN amplifies small errors.
        assert float(jnp.max(jnp.abs(node - rn))) < 0.3, k
        assert float(jnp.max(jnp.abs(edge - re_))) < 0.3, k
    print("KERNEL_OK")
</pallas_src>

<mosaic_0001>
module attributes {stable_mosaic.version = 11 : i64} {
  func.func @_hgnn_kernel(%arg0: i32, %arg1: memref<3xi32, #tpu.memory_space<smem>>, %arg2: memref<16x128xf32, #tpu.memory_space<vmem>>, %arg3: memref<1x8x16xbf16, #tpu.memory_space<vmem>>, %arg4: memref<128x128xbf16, #tpu.memory_space<vmem>>, %arg5: memref<128x128xbf16, #tpu.memory_space<vmem>>, %arg6: memref<1x128xf32, #tpu.memory_space<vmem>>, %arg7: memref<1x128xf32, #tpu.memory_space<vmem>>, %arg8: memref<128x128xbf16, #tpu.memory_space<vmem>>, %arg9: memref<1x128xf32, #tpu.memory_space<vmem>>, %arg10: memref<1x128xf32, #tpu.memory_space<vmem>>, %arg11: memref<1x1xf32, #tpu.memory_space<vmem>>, %arg12: memref<1x16x128xf32, #tpu.memory_space<vmem>>, %arg13: memref<1x8x128xf32, #tpu.memory_space<vmem>>, %arg14: memref<16x128xf32, #tpu.memory_space<vmem>>) attributes {dimension_semantics = [#tpu.dimension_semantics<arbitrary>], iteration_bounds = array<i64: 3>, scalar_prefetch = 1 : i64, scratch_operands = 1 : i64, tpu.core_type = #tpu.core_type<tc>, window_params = [{pipeline_mode = #tpu.pipeline_mode<synchronous>, transform_indices = @transform_0, window_bounds = array<i64: 16, 128>}, {transform_indices = @transform_1, window_bounds = array<i64: 1, 8, 16>}, {pipeline_mode = #tpu.pipeline_mode<synchronous>, transform_indices = @transform_2, window_bounds = array<i64: 128, 128>}, {pipeline_mode = #tpu.pipeline_mode<synchronous>, transform_indices = @transform_3, window_bounds = array<i64: 128, 128>}, {pipeline_mode = #tpu.pipeline_mode<synchronous>, transform_indices = @transform_4, window_bounds = array<i64: 1, 128>}, {pipeline_mode = #tpu.pipeline_mode<synchronous>, transform_indices = @transform_5, window_bounds = array<i64: 1, 128>}, {pipeline_mode = #tpu.pipeline_mode<synchronous>, transform_indices = @transform_6, window_bounds = array<i64: 128, 128>}, {pipeline_mode = #tpu.pipeline_mode<synchronous>, transform_indices = @transform_7, window_bounds = array<i64: 1, 128>}, {pipeline_mode = #tpu.pipeline_mode<synchronous>, transform_indices = @transform_8, window_bounds = array<i64: 1, 128>}, {pipeline_mode = #tpu.pipeline_mode<synchronous>, transform_indices = @transform_9, window_bounds = array<i64: 1, 1>}, {transform_indices = @transform_10, window_bounds = array<i64: 1, 16, 128>}, {transform_indices = @transform_11, window_bounds = array<i64: 1, 8, 128>}]} {
    %c0_i32 = arith.constant 0 : i32
    %0 = arith.cmpi eq, %arg0, %c0_i32 : i32
    %1 = arith.extui %0 : i1 to i32
    %c0_i32_0 = arith.constant 0 : i32
    %2 = arith.cmpi ne, %1, %c0_i32_0 : i32
    scf.if %2 {
      %c0_56 = arith.constant 0 : index
      %c0_57 = arith.constant 0 : index
      %150 = vector.load %arg2[%c0_56, %c0_57] : memref<16x128xf32, #tpu.memory_space<vmem>>, vector<16x128xf32>
      %c0_58 = arith.constant 0 : index
      %c0_59 = arith.constant 0 : index
      %151 = vector.load %arg14[%c0_58, %c0_59] : memref<16x128xf32, #tpu.memory_space<vmem>>, vector<16x128xf32>
      tpu.vector_store %arg14[%c0_58, %c0_59], %150 {strides = array<i32>} : memref<16x128xf32, #tpu.memory_space<vmem>>, vector<16x128xf32>,
    } else {
    }
    %c0 = arith.constant 0 : index
    %c0_1 = arith.constant 0 : index
    %3 = vector.load %arg14[%c0, %c0_1] : memref<16x128xf32, #tpu.memory_space<vmem>>, vector<16x128xf32>
    %c0_2 = arith.constant 0 : index
    %c0_3 = arith.constant 0 : index
    %c0_4 = arith.constant 0 : index
    %4 = vector.load %arg3[%c0_2, %c0_3, %c0_4] : memref<1x8x16xbf16, #tpu.memory_space<vmem>>, vector<1x8x16xbf16>
    %5 = vector.shape_cast %4 : vector<1x8x16xbf16> to vector<8x16xbf16>
    %6 = arith.extf %5 : vector<8x16xbf16> to vector<8x16xf32>
    %7 = arith.index_cast %arg0 : i32 to index
    %8 = memref.load %arg1[%7] : memref<3xi32, #tpu.memory_space<smem>>
    %9 = tpu.iota {dimensions = array<i32: 0>} : vector<8x16xi32>
    %10 = vector.broadcast %8 : i32 to vector<8x16xi32>
    %11 = arith.cmpi slt, %9, %10 : vector<8x16xi32>
    %12 = vector.shape_cast %6 : vector<8x16xf32> to vector<1x8x16xf32>
    %cst = arith.constant dense<0xFF800000> : vector<1xf32>
    %13 = vector.multi_reduction <maximumf>, %12, %cst [1, 2] : vector<1x8x16xf32> to vector<1xf32>
    %14 = vector.shape_cast %13 : vector<1xf32> to vector<1x1x1xf32>
    %15 = vector.extract %14[0, 0, 0] : f32 from vector<1x1x1xf32>
    %16 = vector.broadcast %15 : f32 to vector<8x16xf32>
    %17 = arith.subf %6, %16 : vector<8x16xf32>
    %18 = math.exp %17 : vector<8x16xf32>
    %cst_5 = arith.constant 0.000000e+00 : f32
    %19 = vector.broadcast %cst_5 : f32 to vector<8x16xf32>
    %20 = arith.select %11, %18, %19 : vector<8x16xi1>, vector<8x16xf32>
    %cst_6 = arith.constant dense<0.000000e+00> : vector<8xf32>
    %21 = vector.multi_reduction <add>, %20, %cst_6 [1] : vector<8x16xf32> to vector<8xf32>
    %22 = vector.shape_cast %21 : vector<8xf32> to vector<8x1xf32>
    %23 = tpu.reciprocal %22 {approx = true} : vector<8x1xf32> -> vector<8x1xf32>
    %24 = vector.broadcast %23 : vector<8x1xf32> to vector<8x16xf32>
    %25 = arith.mulf %20, %24 : vector<8x16xf32>
    %cst_7 = arith.constant 0.000000e+00 : f32
    %26 = vector.broadcast %cst_7 : f32 to vector<8x16xf32>
    %27 = arith.select %11, %25, %26 : vector<8x16xi1>, vector<8x16xf32>
    %cst_8 = arith.constant dense<0.000000e+00> : vector<16xf32>
    %28 = vector.multi_reduction <add>, %20, %cst_8 [0] : vector<8x16xf32> to vector<16xf32>
    %29 = vector.shape_cast %28 : vector<16xf32> to vector<1x16xf32>
    %30 = tpu.reciprocal %29 {approx = true} : vector<1x16xf32> -> vector<1x16xf32>
    %31 = vector.broadcast %30 : vector<1x16xf32> to vector<8x16xf32>
    %32 = arith.mulf %20, %31 : vector<8x16xf32>
    %33 = arith.truncf %3 : vector<16x128xf32> to vector<16x128xbf16>
    %c0_9 = arith.constant 0 : index
    %c0_10 = arith.constant 0 : index
    %34 = vector.load %arg4[%c0_9, %c0_10] : memref<128x128xbf16, #tpu.memory_space<vmem>>, vector<128x128xbf16>
    %cst_11 = arith.constant dense<0.000000e+00> : vector<16x128xf32>
    %35 = tpu.matmul %33, %34, %cst_11 {dimension_numbers = #tpu.dot_dimension_numbers<[1], [0], [0], [1], [0, 0, 1, 1], [], []>} : vector<16x128xbf16>, vector<128x128xbf16>, vector<16x128xf32> -> vector<16x128xf32>
    %36 = arith.truncf %27 : vector<8x16xf32> to vector<8x16xbf16>
    %37 = arith.truncf %35 : vector<16x128xf32> to vector<16x128xbf16>
    %cst_12 = arith.constant dense<0.000000e+00> : vector<8x128xf32>
    %38 = tpu.matmul %36, %37, %cst_12 {dimension_numbers = #tpu.dot_dimension_numbers<[1], [0], [0], [1], [0, 0, 1, 1], [], []>} : vector<8x16xbf16>, vector<16x128xbf16>, vector<8x128xf32> -> vector<8x128xf32>
    %cst_13 = arith.constant 0.000000e+00 : f32
    %39 = vector.broadcast %cst_13 : f32 to vector<8x128xf32>
    %40 = arith.maximumf %38, %39 : vector<8x128xf32>
    %41 = arith.truncf %40 : vector<8x128xf32> to vector<8x128xbf16>
    %c0_14 = arith.constant 0 : index
    %c0_15 = arith.constant 0 : index
    %42 = vector.load %arg5[%c0_14, %c0_15] : memref<128x128xbf16, #tpu.memory_space<vmem>>, vector<128x128xbf16>
    %cst_16 = arith.constant dense<0.000000e+00> : vector<8x128xf32>
    %43 = tpu.matmul %41, %42, %cst_16 {dimension_numbers = #tpu.dot_dimension_numbers<[1], [0], [0], [1], [0, 0, 1, 1], [], []>} : vector<8x128xbf16>, vector<128x128xbf16>, vector<8x128xf32> -> vector<8x128xf32>
    %44 = arith.truncf %32 : vector<8x16xf32> to vector<8x16xbf16>
    %45 = arith.truncf %43 : vector<8x128xf32> to vector<8x128xbf16>
    %cst_17 = arith.constant dense<0.000000e+00> : vector<16x128xf32>
    %46 = tpu.matmul %44, %45, %cst_17 {dimension_numbers = #tpu.dot_dimension_numbers<[0], [0], [1], [1], [0, 1, 1, 1], [], []>} : vector<8x16xbf16>, vector<8x128xbf16>, vector<16x128xf32> -> vector<16x128xf32>
    %cst_18 = arith.constant 0.000000e+00 : f32
    %47 = vector.broadcast %cst_18 : f32 to vector<16x128xf32>
    %48 = arith.maximumf %46, %47 : vector<16x128xf32>
    %49 = arith.truncf %48 : vector<16x128xf32> to vector<16x128xbf16>
    %cst_19 = arith.constant dense<0.000000e+00> : vector<8x128xf32>
    %50 = tpu.matmul %36, %49, %cst_19 {dimension_numbers = #tpu.dot_dimension_numbers<[1], [0], [0], [1], [0, 0, 1, 1], [], []>} : vector<8x16xbf16>, vector<16x128xbf16>, vector<8x128xf32> -> vector<8x128xf32>
    %cst_20 = arith.constant 0.000000e+00 : f32
    %51 = vector.broadcast %cst_20 : f32 to vector<8x128xf32>
    %52 = arith.maximumf %50, %51 : vector<8x128xf32>
    %c0_21 = arith.constant 0 : index
    %c0_22 = arith.constant 0 : index
    %53 = vector.load %arg6[%c0_21, %c0_22] : memref<1x128xf32, #tpu.memory_space<vmem>>, vector<1x128xf32>
    %c0_23 = arith.constant 0 : index
    %c0_24 = arith.constant 0 : index
    %54 = vector.load %arg7[%c0_23, %c0_24] : memref<1x128xf32, #tpu.memory_space<vmem>>, vector<1x128xf32>
    %cst_25 = arith.constant dense<0.000000e+00> : vector<128xf32>
    %55 = vector.multi_reduction <add>, %48, %cst_25 [0] : vector<16x128xf32> to vector<128xf32>
    %56 = vector.shape_cast %55 : vector<128xf32> to vector<1x128xf32>
    %cst_26 = arith.constant 6.250000e-02 : f32
    %57 = vector.broadcast %cst_26 : f32 to vector<1x128xf32>
    %58 = arith.mulf %56, %57 : vector<1x128xf32>
    %59 = arith.mulf %48, %48 : vector<16x128xf32>
    %cst_27 = arith.constant dense<0.000000e+00> : vector<128xf32>
    %60 = vector.multi_reduction <add>, %59, %cst_27 [0] : vector<16x128xf32> to vector<128xf32>
    %61 = vector.shape_cast %60 : vector<128xf32> to vector<1x128xf32>
    %cst_28 = arith.constant 6.250000e-02 : f32
    %62 = vector.broadcast %cst_28 : f32 to vector<1x128xf32>
    %63 = arith.mulf %61, %62 : vector<1x128xf32>
    %64 = arith.mulf %58, %58 : vector<1x128xf32>
    %65 = arith.subf %63, %64 : vector<1x128xf32>
    %cst_29 = arith.constant 0.000000e+00 : f32
    %66 = vector.broadcast %cst_29 : f32 to vector<1x128xf32>
    %67 = arith.maximumf %65, %66 : vector<1x128xf32>
    %68 = vector.broadcast %58 : vector<1x128xf32> to vector<16x128xf32>
    %69 = arith.subf %48, %68 : vector<16x128xf32>
    %cst_30 = arith.constant 9.99999974E-6 : f32
    %70 = vector.broadcast %cst_30 : f32 to vector<1x128xf32>
    %71 = arith.addf %67, %70 : vector<1x128xf32>
    %72 = math.rsqrt %71 : vector<1x128xf32>
    %73 = vector.broadcast %72 : vector<1x128xf32> to vector<16x128xf32>
    %74 = arith.mulf %69, %73 : vector<16x128xf32>
    %75 = vector.broadcast %53 : vector<1x128xf32> to vector<16x128xf32>
    %76 = arith.mulf %74, %75 : vector<16x128xf32>
    %77 = vector.broadcast %54 : vector<1x128xf32> to vector<16x128xf32>
    %78 = arith.addf %76, %77 : vector<16x128xf32>
    %79 = arith.sitofp %8 : i32 to f32
    %cst_31 = arith.constant 1.000000e+00 : f32
    %80 = arith.divf %cst_31, %79 : f32
    %cst_32 = arith.constant dense<0.000000e+00> : vector<128xf32>
    %81 = vector.multi_reduction <add>, %52, %cst_32 [0] : vector<8x128xf32> to vector<128xf32>
    %82 = vector.shape_cast %81 : vector<128xf32> to vector<1x128xf32>
    %83 = vector.broadcast %80 : f32 to vector<1x128xf32>
    %84 = arith.mulf %82, %83 : vector<1x128xf32>
    %85 = arith.mulf %52, %52 : vector<8x128xf32>
    %cst_33 = arith.constant dense<0.000000e+00> : vector<128xf32>
    %86 = vector.multi_reduction <add>, %85, %cst_33 [0] : vector<8x128xf32> to vector<128xf32>
    %87 = vector.shape_cast %86 : vector<128xf32> to vector<1x128xf32>
    %88 = vector.broadcast %80 : f32 to vector<1x128xf32>
    %89 = arith.mulf %87, %88 : vector<1x128xf32>
    %90 = arith.mulf %84, %84 : vector<1x128xf32>
    %91 = arith.subf %89, %90 : vector<1x128xf32>
    %cst_34 = arith.constant 0.000000e+00 : f32
    %92 = vector.broadcast %cst_34 : f32 to vector<1x128xf32>
    %93 = arith.maximumf %91, %92 : vector<1x128xf32>
    %94 = vector.broadcast %84 : vector<1x128xf32> to vector<8x128xf32>
    %95 = arith.subf %52, %94 : vector<8x128xf32>
    %cst_35 = arith.constant 9.99999974E-6 : f32
    %96 = vector.broadcast %cst_35 : f32 to vector<1x128xf32>
    %97 = arith.addf %93, %96 : vector<1x128xf32>
    %98 = math.rsqrt %97 : vector<1x128xf32>
    %99 = vector.broadcast %98 : vector<1x128xf32> to vector<8x128xf32>
    %100 = arith.mulf %95, %99 : vector<8x128xf32>
    %101 = vector.broadcast %53 : vector<1x128xf32> to vector<8x128xf32>
    %102 = arith.mulf %100, %101 : vector<8x128xf32>
    %103 = vector.broadcast %54 : vector<1x128xf32> to vector<8x128xf32>
    %104 = arith.addf %102, %103 : vector<8x128xf32>
    %c0_36 = arith.constant 0 : index
    %c0_37 = arith.constant 0 : index
    %105 = vector.load %arg8[%c0_36, %c0_37] : memref<128x128xbf16, #tpu.memory_space<vmem>>, vector<128x128xbf16>
    %c0_38 = arith.constant 0 : index
    %c0_39 = arith.constant 0 : index
    %106 = vector.load %arg9[%c0_38, %c0_39] : memref<1x128xf32, #tpu.memory_space<vmem>>, vector<1x128xf32>
    %c0_40 = arith.constant 0 : index
    %c0_41 = arith.constant 0 : index
    %107 = vector.load %arg10[%c0_40, %c0_41] : memref<1x128xf32, #tpu.memory_space<vmem>>, vector<1x128xf32>
    %c0_42 = arith.constant 0 : index
    %c0_43 = arith.constant 0 : index
    %108 = vector.load %arg11[%c0_42, %c0_43] : memref<1x1xf32, #tpu.memory_space<vmem>>, vector<1x1xf32>
    %cst_44 = arith.constant dense<0.000000e+00> : vector<16x128xf32>
    %109 = tpu.matmul %33, %105, %cst_44 {dimension_numbers = #tpu.dot_dimension_numbers<[1], [0], [0], [1], [0, 0, 1, 1], [], []>} : vector<16x128xbf16>, vector<128x128xbf16>, vector<16x128xf32> -> vector<16x128xf32>
    %110 = vector.broadcast %106 : vector<1x128xf32> to vector<16x128xf32>
    %111 = arith.addf %109, %110 : vector<16x128xf32>
    %112 = math.tanh %111 : vector<16x128xf32>
    %113 = arith.truncf %78 : vector<16x128xf32> to vector<16x128xbf16>
    %cst_45 = arith.constant dense<0.000000e+00> : vector<16x128xf32>
    %114 = tpu.matmul %113, %105, %cst_45 {dimension_numbers = #tpu.dot_dimension_numbers<[1], [0], [0], [1], [0, 0, 1, 1], [], []>} : vector<16x128xbf16>, vector<128x128xbf16>, vector<16x128xf32> -> vector<16x128xf32>
    %115 = vector.broadcast %106 : vector<1x128xf32> to vector<16x128xf32>
    %116 = arith.addf %114, %115 : vector<16x128xf32>
    %117 = math.tanh %116 : vector<16x128xf32>
    %118 = vector.broadcast %107 : vector<1x128xf32> to vector<16x128xf32>
    %119 = arith.mulf %112, %118 : vector<16x128xf32>
    %cst_46 = arith.constant dense<0.000000e+00> : vector<16xf32>
    %120 = vector.multi_reduction <add>, %119, %cst_46 [1] : vector<16x128xf32> to vector<16xf32>
    %121 = vector.shape_cast %120 : vector<16xf32> to vector<16x1xf32>
    %122 = vector.broadcast %108 : vector<1x1xf32> to vector<16x1xf32>
    %123 = arith.addf %121, %122 : vector<16x1xf32>
    %124 = vector.broadcast %107 : vector<1x128xf32> to vector<16x128xf32>
    %125 = arith.mulf %117, %124 : vector<16x128xf32>
    %cst_47 = arith.constant dense<0.000000e+00> : vector<16xf32>
    %126 = vector.multi_reduction <add>, %125, %cst_47 [1] : vector<16x128xf32> to vector<16xf32>
    %127 = vector.shape_cast %126 : vector<16xf32> to vector<16x1xf32>
    %128 = vector.broadcast %108 : vector<1x1xf32> to vector<16x1xf32>
    %129 = arith.addf %127, %128 : vector<16x1xf32>
    %130 = arith.maximumf %123, %129 : vector<16x1xf32>
    %131 = arith.subf %123, %130 : vector<16x1xf32>
    %132 = math.exp %131 : vector<16x1xf32>
    %133 = arith.subf %129, %130 : vector<16x1xf32>
    %134 = math.exp %133 : vector<16x1xf32>
    %135 = arith.addf %132, %134 : vector<16x1xf32>
    %136 = arith.divf %132, %135 : vector<16x1xf32>
    %137 = arith.divf %134, %135 : vector<16x1xf32>
    %138 = vector.broadcast %136 : vector<16x1xf32> to vector<16x128xf32>
    %139 = arith.mulf %138, %3 : vector<16x128xf32>
    %140 = vector.broadcast %137 : vector<16x1xf32> to vector<16x128xf32>
    %141 = arith.mulf %140, %78 : vector<16x128xf32>
    %142 = arith.addf %139, %141 : vector<16x128xf32>
    %c0_48 = arith.constant 0 : index
    %c0_49 = arith.constant 0 : index
    %143 = vector.load %arg14[%c0_48, %c0_49] : memref<16x128xf32, #tpu.memory_space<vmem>>, vector<16x128xf32>
    tpu.vector_store %arg14[%c0_48, %c0_49], %142 {strides = array<i32>} : memref<16x128xf32, #tpu.memory_space<vmem>>, vector<16x128xf32>,
    %c0_50 = arith.constant 0 : index
    %c0_51 = arith.constant 0 : index
    %c0_52 = arith.constant 0 : index
    %144 = vector.load %arg12[%c0_50, %c0_51, %c0_52] : memref<1x16x128xf32, #tpu.memory_space<vmem>>, vector<1x16x128xf32>
    %145 = vector.shape_cast %144 : vector<1x16x128xf32> to vector<16x128xf32>
    %146 = vector.shape_cast %142 : vector<16x128xf32> to vector<1x16x128xf32>
    tpu.vector_store %arg12[%c0_50, %c0_51, %c0_52], %146 {strides = array<i32>} : memref<1x16x128xf32, #tpu.memory_space<vmem>>, vector<1x16x128xf32>,
    %c0_53 = arith.constant 0 : index
    %c0_54 = arith.constant 0 : index
    %c0_55 = arith.constant 0 : index
    %147 = vector.load %arg13[%c0_53, %c0_54, %c0_55] : memref<1x8x128xf32, #tpu.memory_space<vmem>>, vector<1x8x128xf32>
    %148 = vector.shape_cast %147 : vector<1x8x128xf32> to vector<8x128xf32>
    %149 = vector.shape_cast %104 : vector<8x128xf32> to vector<1x8x128xf32>
    tpu.vector_store %arg13[%c0_53, %c0_54, %c0_55], %149 {strides = array<i32>} : memref<1x8x128xf32, #tpu.memory_space<vmem>>, vector<1x8x128xf32>,
    return
  }
  func.func @transform_0(%arg0: i32, %arg1: memref<3xi32, #tpu.memory_space<smem>>) -> (i32, i32) {
    %c0_i32 = arith.constant 0 : i32
    %c0_i32_0 = arith.constant 0 : i32
    %c0_i32_1 = arith.constant 0 : i32
    return %c0_i32, %c0_i32_0 : i32, i32
  }
  func.func @transform_1(%arg0: i32, %arg1: memref<3xi32, #tpu.memory_space<smem>>) -> (i32, i32, i32) {
    %c0_i32 = arith.constant 0 : i32
    %c0_i32_0 = arith.constant 0 : i32
    %c0_i32_1 = arith.constant 0 : i32
    return %arg0, %c0_i32, %c0_i32_0 : i32, i32, i32
  }
  func.func @transform_2(%arg0: i32, %arg1: memref<3xi32, #tpu.memory_space<smem>>) -> (i32, i32) {
    %c0_i32 = arith.constant 0 : i32
    %c0_i32_0 = arith.constant 0 : i32
    %c0_i32_1 = arith.constant 0 : i32
    return %c0_i32, %c0_i32_0 : i32, i32
  }
  func.func @transform_3(%arg0: i32, %arg1: memref<3xi32, #tpu.memory_space<smem>>) -> (i32, i32) {
    %c0_i32 = arith.constant 0 : i32
    %c0_i32_0 = arith.constant 0 : i32
    %c0_i32_1 = arith.constant 0 : i32
    return %c0_i32, %c0_i32_0 : i32, i32
  }
  func.func @transform_4(%arg0: i32, %arg1: memref<3xi32, #tpu.memory_space<smem>>) -> (i32, i32) {
    %c0_i32 = arith.constant 0 : i32
    %c0_i32_0 = arith.constant 0 : i32
    %c0_i32_1 = arith.constant 0 : i32
    return %c0_i32, %c0_i32_0 : i32, i32
  }
  func.func @transform_5(%arg0: i32, %arg1: memref<3xi32, #tpu.memory_space<smem>>) -> (i32, i32) {
    %c0_i32 = arith.constant 0 : i32
    %c0_i32_0 = arith.constant 0 : i32
    %c0_i32_1 = arith.constant 0 : i32
    return %c0_i32, %c0_i32_0 : i32, i32
  }
  func.func @transform_6(%arg0: i32, %arg1: memref<3xi32, #tpu.memory_space<smem>>) -> (i32, i32) {
    %c0_i32 = arith.constant 0 : i32
    %c0_i32_0 = arith.constant 0 : i32
    %c0_i32_1 = arith.constant 0 : i32
    return %c0_i32, %c0_i32_0 : i32, i32
  }
  func.func @transform_7(%arg0: i32, %arg1: memref<3xi32, #tpu.memory_space<smem>>) -> (i32, i32) {
    %c0_i32 = arith.constant 0 : i32
    %c0_i32_0 = arith.constant 0 : i32
    %c0_i32_1 = arith.constant 0 : i32
    return %c0_i32, %c0_i32_0 : i32, i32
  }
  func.func @transform_8(%arg0: i32, %arg1: memref<3xi32, #tpu.memory_space<smem>>) -> (i32, i32) {
    %c0_i32 = arith.constant 0 : i32
    %c0_i32_0 = arith.constant 0 : i32
    %c0_i32_1 = arith.constant 0 : i32
    return %c0_i32, %c0_i32_0 : i32, i32
  }
  func.func @transform_9(%arg0: i32, %arg1: memref<3xi32, #tpu.memory_space<smem>>) -> (i32, i32) {
    %c0_i32 = arith.constant 0 : i32
    %c0_i32_0 = arith.constant 0 : i32
    %c0_i32_1 = arith.constant 0 : i32
    return %c0_i32, %c0_i32_0 : i32, i32
  }
  func.func @transform_10(%arg0: i32, %arg1: memref<3xi32, #tpu.memory_space<smem>>) -> (i32, i32, i32) {
    %c0_i32 = arith.constant 0 : i32
    %c0_i32_0 = arith.constant 0 : i32
    %c0_i32_1 = arith.constant 0 : i32
    return %arg0, %c0_i32, %c0_i32_0 : i32, i32, i32
  }
  func.func @transform_11(%arg0: i32, %arg1: memref<3xi32, #tpu.memory_space<smem>>) -> (i32, i32, i32) {
    %c0_i32 = arith.constant 0 : i32
    %c0_i32_0 = arith.constant 0 : i32
    %c0_i32_1 = arith.constant 0 : i32
    return %arg0, %c0_i32, %c0_i32_0 : i32, i32, i32
  }
}

</mosaic_0001>

<llo_original>
// kernel: tpu_custom_call.1
$region0: #{tpu_custom_call.1}
  #allocation0 [shape = 'u32[]', space=smem, size = 0x4, offset = 0x4, fixed_abs, tag = 'smem constant byte address 0x4 - core index']
  #allocation1 [shape = 'u32[144,128]{1,0:T(1,128)}', space=vmem, size = 0x12000, scoped, tag = 'internal scratch']
  #allocation2 [shape = 'f32[16,128]{1,0:T(8,128)}', space=vmem, size = 0x2000, scoped, tag = 'scratch operand']
  #allocation3 [shape = 's32[1]{0}', space=sflag, size = 0x4, scoped, tag = 'scoped memory for tpu_custom_call.1']
  #allocation4 [shape = 'u8[512]{0}', space=smem, size = 0x200, scoped, tag = 'prefetched SMEM operand 0']
  #allocation5 [shape = 'f32[1,1]{1,0:T(1,128)S(1)}', space=vmem, size = 0x200, scoped, tag = 'scoped memory for tpu_custom_call.1']
  %s0 = inlined_call_operand.vmem [shape: s32[3], index: 0, kind: input, shape index: {}]
  %s1 = inlined_call_operand.hbm [shape: f32[16,128], index: 1, kind: input, shape index: {}]
  %s2 = inlined_call_operand.hbm [shape: bf16[3,8,16], index: 2, kind: input, shape index: {}]
  %s3 = inlined_call_operand.hbm [shape: bf16[128,128], index: 3, kind: input, shape index: {}]
  %s4 = inlined_call_operand.hbm [shape: bf16[128,128], index: 4, kind: input, shape index: {}]
  %s5 = inlined_call_operand.vmem [shape: f32[1,128], index: 5, kind: input, shape index: {}]
  %s6 = inlined_call_operand.vmem [shape: f32[1,128], index: 6, kind: input, shape index: {}]
  %s7 = inlined_call_operand.hbm [shape: bf16[128,128], index: 7, kind: input, shape index: {}]
  %s8 = inlined_call_operand.vmem [shape: f32[1,128], index: 8, kind: input, shape index: {}]
  %s9 = inlined_call_operand.vmem [shape: f32[1,128], index: 9, kind: input, shape index: {}]
  %s10 = inlined_call_operand.<no memory space> [shape: f32[1,1], index: 10, kind: input, shape index: {}]
  %s11 = inlined_call_operand.hbm [shape: f32[3,16,128], index: 11, kind: output, shape index: {0}]
  %s12 = inlined_call_operand.hbm [shape: f32[3,8,128], index: 12, kind: output, shape index: {1}]
  %13 = xla_tuple %s11, %s12
  %s14 = sld [smem:[#allocation0]]
  $region105: #{tpu_custom_call.1} parent=0
    _
  %s16 = ssub.s32 1, %s14
  %s17 = scalar_select 0, %s16, %s14
  %s18 = sshll.u32 %s0, 4
  %s19 = int_to_ptr.vmem [resolvable:$true] %s18
  %21 = dma.vmem_to_smem %s19, 16, [#allocation4], [#allocation3]
  %v22 = vstv %s10
  %23 = vst [vmem:[#allocation5] sm:$0x1] %v22
  %24 = dma.done [#allocation3], 16
  %25 = sfence
  $region1: #{tpu_custom_call.1} parent=0
    #allocation6 [shape = 'u8[8192]{0}', space=vmem, size = 0x2000, scoped, tag = 'input window, operand 1, single buffered']
    #allocation7 [shape = 's32[2]{0}', space=sflag, size = 0x8, scoped, tag = 'scoped memory for tpu_custom_call.1']
    #allocation8 [shape = 's32[2]{0}', space=sflag, size = 0x8, scoped, tag = 'scoped memory for tpu_custom_call.1']
    #allocation9 [shape = 'u8[4096]{0}', space=vmem, size = 0x1000, scoped, tag = 'input window, operand 2']
    #allocation10 [shape = 's32[2]{0}', space=sflag, size = 0x8, scoped, tag = 'scoped memory for tpu_custom_call.1']
    #allocation11 [shape = 'u8[32768]{0}', space=vmem, size = 0x8000, scoped, tag = 'input window, operand 3, single buffered']
    #allocation12 [shape = 'u8[32768]{0}', space=vmem, size = 0x8000, scoped, tag = 'input window, operand 4, single buffered']
    #allocation13 [shape = 's32[1]{0}', space=sflag, size = 0x4, scoped, tag = 'scoped memory for tpu_custom_call.1']
    #allocation14 [shape = 'u8[32768]{0}', space=vmem, size = 0x8000, scoped, tag = 'input window, operand 7, single buffered']
    #allocation15 [shape = 'u8[16384]{0}', space=vmem, size = 0x4000, scoped, tag = 'output window, operand 0']
    #allocation16 [shape = 'u8[8192]{0}', space=vmem, size = 0x2000, scoped, tag = 'output window, operand 1']
    #allocation17 [shape = 's32[2]{0}', space=sflag, size = 0x8, scoped, tag = 'scoped memory for tpu_custom_call.1']
    %26 = vsyncpa [#allocation7], 0
    %27 = vsyncpa [#allocation10], 0
    %s28 = scalar_lea.sflag [#allocation10], 1
    %29 = vsyncpa %s28, 0
    %30 = vsyncpa [#allocation13], 0
    %31 = vsyncpa [#allocation8], 0
    %s32 = scalar_lea.sflag [#allocation8], 1
    %33 = vsyncpa %s32, 0
    %34 = vsyncpa [#allocation17], 0
    %s35 = scalar_lea.sflag [#allocation17], 1
    %36 = vsyncpa %s35, 0
    loop: start=0, step=1, limit=5
    $region2: #{tpu_custom_call.1} parent=1 // loop_pre_header
      _
    $region3: #{tpu_custom_call.1} parent=1 // loop_header
      %s38 = sphi 0, %s42
      %p39 = scmp.ge.s32.totalorder %s38, 5
      %s46 = sphi 0, %s46
      %s48 = sphi 0, %s46
      %s49 = sphi 0, %s48
      %s63 = sphi 0, %s49
      %s69 = sphi 0, %s71
      %s72 = sphi 0, %s69
      %s73 = sphi 0, %s72
      %s89 = sphi 0, %s73
      %s93 = sphi 0, %s93
      %s95 = sphi 0, %s93
      %s96 = sphi 0, %s95
      %s110 = sphi 0, %s96
      %s114 = sphi 0, %s114
      %s116 = sphi 0, %s114
      %s117 = sphi 0, %s116
      %s131 = sphi 0, %s117
      %s135 = sphi 0, %s135
      %s137 = sphi 0, %s135
      %s138 = sphi 0, %s137
      %s152 = sphi 0, %s138
      %s156 = sphi 0, %s156
      %s158 = sphi 0, %s156
      %s159 = sphi 0, %s158
      %s173 = sphi 0, %s159
      %s177 = sphi 0, %s177
      %s179 = sphi 0, %s177
      %s180 = sphi 0, %s179
      %s194 = sphi 0, %s180
      %s198 = sphi 0, %s198
      %s200 = sphi 0, %s198
      %s201 = sphi 0, %s200
      %s215 = sphi 0, %s201
      %s219 = sphi 0, %s219
      %s221 = sphi 0, %s219
      %s222 = sphi 0, %s221
      %s236 = sphi 0, %s222
      %s240 = sphi 0, %s240
      %s242 = sphi 0, %s240
      %s243 = sphi 0, %s242
      %s257 = sphi 0, %s243
      %s263 = sphi 0, %s265
      %s266 = sphi 0, %s263
      %s267 = sphi 0, %s266
      %s283 = sphi 0, %s267
      %s289 = sphi 0, %s291
      %s292 = sphi 0, %s289
      %s293 = sphi 0, %s292
      %s309 = sphi 0, %s293
    $region4: #{tpu_custom_call.1} parent=1 // loop_header_branch
      %41 = sbr.rel (%p39) target = $region8
    $region5: #{tpu_custom_call.1} parent=1 // loop_body
      %s43 = ssub.s32 %s38, 1
      %s44 = ssub.s32 %s38, 2
      %s45 = sadd.s32 %s38, 1
      %s47 = sadd.s32 %s46, 1
      %p50 = scmp.eq.s32.totalorder %s38, 2
      %p51 = scmp.ne.s32.totalorder %s46, %s48
      %p52 = scmp.eq.s32.totalorder %s38, 0
      %p53 = por %p51, %p52
      %p54 = scmp.ne.s32.totalorder %s46, %s48
      %p55 = scmp.eq.s32.totalorder %s43, 2
      %p56 = por %p54, %p55
      %p57 = scmp.ne.s32.totalorder %s48, %s49
      %p58 = scmp.eq.s32.totalorder %s43, 0
      %p59 = por %p57, %p58
      %p60 = scmp.ne.s32.totalorder %s48, %s49
      %p61 = scmp.eq.s32.totalorder %s44, 2
      %p62 = por %p60, %p61
      %p64 = scmp.ne.s32.totalorder %s49, %s63
      %p65 = scmp.eq.s32.totalorder %s44, 0
      %p66 = por %p64, %p65
      %s67 = ssub.s32 %s38, %s45
      %p68 = scmp.eq.s32.totalorder %s67, 0
      %s70 = sadd.s32 %s69, 1
      %s71 = scalar_select %p68, %s69, %s70
      %p74 = pneg %p68
      %p75 = scmp.eq.s32.totalorder %s38, 2
      %p76 = por %p74, %p75
      %p77 = scmp.ne.s32.totalorder %s69, %s72
      %p78 = scmp.eq.s32.totalorder %s38, 0
      %p79 = por %p77, %p78
      %p80 = scmp.ne.s32.totalorder %s69, %s72
      %p81 = scmp.eq.s32.totalorder %s43, 2
      %p82 = por %p80, %p81
      %p83 = scmp.ne.s32.totalorder %s72, %s73
      %p84 = scmp.eq.s32.totalorder %s43, 0
      %p85 = por %p83, %p84
      %p86 = scmp.ne.s32.totalorder %s72, %s73
      %p87 = scmp.eq.s32.totalorder %s44, 2
      %p88 = por %p86, %p87
      %p90 = scmp.ne.s32.totalorder %s73, %s89
      %p91 = scmp.eq.s32.totalorder %s44, 0
      %p92 = por %p90, %p91
      %s94 = sadd.s32 %s93, 1
      %p97 = scmp.eq.s32.totalorder %s38, 2
      %p98 = scmp.ne.s32.totalorder %s93, %s95
      %p99 = scmp.eq.s32.totalorder %s38, 0
      %p100 = por %p98, %p99
      %p101 = scmp.ne.s32.totalorder %s93, %s95
      %p102 = scmp.eq.s32.totalorder %s43, 2
      %p103 = por %p101, %p102
      %p104 = scmp.ne.s32.totalorder %s95, %s96
      %p105 = scmp.eq.s32.totalorder %s43, 0
      %p106 = por %p104, %p105
      %p107 = scmp.ne.s32.totalorder %s95, %s96
      %p108 = scmp.eq.s32.totalorder %s44, 2
      %p109 = por %p107, %p108
      %p111 = scmp.ne.s32.totalorder %s96, %s110
      %p112 = scmp.eq.s32.totalorder %s44, 0
      %p113 = por %p111, %p112
      %s115 = sadd.s32 %s114, 1
      %p118 = scmp.eq.s32.totalorder %s38, 2
      %p119 = scmp.ne.s32.totalorder %s114, %s116
      %p120 = scmp.eq.s32.totalorder %s38, 0
      %p121 = por %p119, %p120
      %p122 = scmp.ne.s32.totalorder %s114, %s116
      %p123 = scmp.eq.s32.totalorder %s43, 2
      %p124 = por %p122, %p123
      %p125 = scmp.ne.s32.totalorder %s116, %s117
      %p126 = scmp.eq.s32.totalorder %s43, 0
      %p127 = por %p125, %p126
      %p128 = scmp.ne.s32.totalorder %s116, %s117
      %p129 = scmp.eq.s32.totalorder %s44, 2
      %p130 = por %p128, %p129
      %p132 = scmp.ne.s32.totalorder %s117, %s131
      %p133 = scmp.eq.s32.totalorder %s44, 0
      %p134 = por %p132, %p133
      %s136 = sadd.s32 %s135, 1
      %p139 = scmp.eq.s32.totalorder %s38, 2
      %p140 = scmp.ne.s32.totalorder %s135, %s137
      %p141 = scmp.eq.s32.totalorder %s38, 0
      %p142 = por %p140, %p141
      %p143 = scmp.ne.s32.totalorder %s135, %s137
      %p144 = scmp.eq.s32.totalorder %s43, 2
      %p145 = por %p143, %p144
      %p146 = scmp.ne.s32.totalorder %s137, %s138
      %p147 = scmp.eq.s32.totalorder %s43, 0
      %p148 = por %p146, %p147
      %p149 = scmp.ne.s32.totalorder %s137, %s138
      %p150 = scmp.eq.s32.totalorder %s44, 2
      %p151 = por %p149, %p150
      %p153 = scmp.ne.s32.totalorder %s138, %s152
      %p154 = scmp.eq.s32.totalorder %s44, 0
      %p155 = por %p153, %p154
      %s157 = sadd.s32 %s156, 1
      %p160 = scmp.eq.s32.totalorder %s38, 2
      %p161 = scmp.ne.s32.totalorder %s156, %s158
      %p162 = scmp.eq.s32.totalorder %s38, 0
      %p163 = por %p161, %p162
      %p164 = scmp.ne.s32.totalorder %s156, %s158
      %p165 = scmp.eq.s32.totalorder %s43, 2
      %p166 = por %p164, %p165
      %p167 = scmp.ne.s32.totalorder %s158, %s159
      %p168 = scmp.eq.s32.totalorder %s43, 0
      %p169 = por %p167, %p168
      %p170 = scmp.ne.s32.totalorder %s158, %s159
      %p171 = scmp.eq.s32.totalorder %s44, 2
      %p172 = por %p170, %p171
      %p174 = scmp.ne.s32.totalorder %s159, %s173
      %p175 = scmp.eq.s32.totalorder %s44, 0
      %p176 = por %p174, %p175
      %s178 = sadd.s32 %s177, 1
      %p181 = scmp.eq.s32.totalorder %s38, 2
      %p182 = scmp.ne.s32.totalorder %s177, %s179
      %p183 = scmp.eq.s32.totalorder %s38, 0
      %p184 = por %p182, %p183
      %p185 = scmp.ne.s32.totalorder %s177, %s179
      %p186 = scmp.eq.s32.totalorder %s43, 2
      %p187 = por %p185, %p186
      %p188 = scmp.ne.s32.totalorder %s179, %s180
      %p189 = scmp.eq.s32.totalorder %s43, 0
      %p190 = por %p188, %p189
      %p191 = scmp.ne.s32.totalorder %s179, %s180
      %p192 = scmp.eq.s32.totalorder %s44, 2
      %p193 = por %p191, %p192
      %p195 = scmp.ne.s32.totalorder %s180, %s194
      %p196 = scmp.eq.s32.totalorder %s44, 0
      %p197 = por %p195, %p196
      %s199 = sadd.s32 %s198, 1
      %p202 = scmp.eq.s32.totalorder %s38, 2
      %p203 = scmp.ne.s32.totalorder %s198, %s200
      %p204 = scmp.eq.s32.totalorder %s38, 0
      %p205 = por %p203, %p204
      %p206 = scmp.ne.s32.totalorder %s198, %s200
      %p207 = scmp.eq.s32.totalorder %s43, 2
      %p208 = por %p206, %p207
      %p209 = scmp.ne.s32.totalorder %s200, %s201
      %p210 = scmp.eq.s32.totalorder %s43, 0
      %p211 = por %p209, %p210
      %p212 = scmp.ne.s32.totalorder %s200, %s201
      %p213 = scmp.eq.s32.totalorder %s44, 2
      %p214 = por %p212, %p213
      %p216 = scmp.ne.s32.totalorder %s201, %s215
      %p217 = scmp.eq.s32.totalorder %s44, 0
      %p218 = por %p216, %p217
      %s220 = sadd.s32 %s219, 1
      %p223 = scmp.eq.s32.totalorder %s38, 2
      %p224 = scmp.ne.s32.totalorder %s219, %s221
      %p225 = scmp.eq.s32.totalorder %s38, 0
      %p226 = por %p224, %p225
      %p227 = scmp.ne.s32.totalorder %s219, %s221
      %p228 = scmp.eq.s32.totalorder %s43, 2
      %p229 = por %p227, %p228
      %p230 = scmp.ne.s32.totalorder %s221, %s222
      %p231 = scmp.eq.s32.totalorder %s43, 0
      %p232 = por %p230, %p231
      %p233 = scmp.ne.s32.totalorder %s221, %s222
      %p234 = scmp.eq.s32.totalorder %s44, 2
      %p235 = por %p233, %p234
      %p237 = scmp.ne.s32.totalorder %s222, %s236
      %p238 = scmp.eq.s32.totalorder %s44, 0
      %p239 = por %p237, %p238
      %s241 = sadd.s32 %s240, 1
      %p244 = scmp.eq.s32.totalorder %s38, 2
      %p245 = scmp.ne.s32.totalorder %s240, %s242
      %p246 = scmp.eq.s32.totalorder %s38, 0
      %p247 = por %p245, %p246
      %p248 = scmp.ne.s32.totalorder %s240, %s242
      %p249 = scmp.eq.s32.totalorder %s43, 2
      %p250 = por %p248, %p249
      %p251 = scmp.ne.s32.totalorder %s242, %s243
      %p252 = scmp.eq.s32.totalorder %s43, 0
      %p253 = por %p251, %p252
      %p254 = scmp.ne.s32.totalorder %s242, %s243
      %p255 = scmp.eq.s32.totalorder %s44, 2
      %p256 = por %p254, %p255
      %p258 = scmp.ne.s32.totalorder %s243, %s257
      %p259 = scmp.eq.s32.totalorder %s44, 0
      %p260 = por %p258, %p259
      %s261 = ssub.s32 %s38, %s45
      %p262 = scmp.eq.s32.totalorder %s261, 0
      %s264 = sadd.s32 %s263, 1
      %s265 = scalar_select %p262, %s263, %s264
      %p268 = pneg %p262
      %p269 = scmp.eq.s32.totalorder %s38, 2
      %p270 = por %p268, %p269
      %p271 = scmp.ne.s32.totalorder %s263, %s266
      %p272 = scmp.eq.s32.totalorder %s38, 0
      %p273 = por %p271, %p272
      %p274 = scmp.ne.s32.totalorder %s263, %s266
      %p275 = scmp.eq.s32.totalorder %s43, 2
      %p276 = por %p274, %p275
      %p277 = scmp.ne.s32.totalorder %s266, %s267
      %p278 = scmp.eq.s32.totalorder %s43, 0
      %p279 = por %p277, %p278
      %p280 = scmp.ne.s32.totalorder %s266, %s267
      %p281 = scmp.eq.s32.totalorder %s44, 2
      %p282 = por %p280, %p281
      %p284 = scmp.ne.s32.totalorder %s267, %s283
      %p285 = scmp.eq.s32.totalorder %s44, 0
      %p286 = por %p284, %p285
      %s287 = ssub.s32 %s38, %s45
      %p288 = scmp.eq.s32.totalorder %s287, 0
      %s290 = sadd.s32 %s289, 1
      %s291 = scalar_select %p288, %s289, %s290
      %p294 = pneg %p288
      %p295 = scmp.eq.s32.totalorder %s38, 2
      %p296 = por %p294, %p295
      %p297 = scmp.ne.s32.totalorder %s289, %s292
      %p298 = scmp.eq.s32.totalorder %s38, 0
      %p299 = por %p297, %p298
      %p300 = scmp.ne.s32.totalorder %s289, %s292
      %p301 = scmp.eq.s32.totalorder %s43, 2
      %p302 = por %p300, %p301
      %p303 = scmp.ne.s32.totalorder %s292, %s293
      %p304 = scmp.eq.s32.totalorder %s43, 0
      %p305 = por %p303, %p304
      %p306 = scmp.ne.s32.totalorder %s292, %s293
      %p307 = scmp.eq.s32.totalorder %s44, 2
      %p308 = por %p306, %p307
      %p310 = scmp.ne.s32.totalorder %s293, %s309
      %p311 = scmp.eq.s32.totalorder %s44, 0
      %p312 = por %p310, %p311
      %p313 = scmp.le.s32.totalorder 1, %s38
      %p314 = scmp.lt.s32.totalorder %s38, 4
      %p315 = pnand %p313, %p314
      %p316 = pneg %p315
      // Predicated region
      $region9: #{tpu_custom_call.1} parent=5 // pred_check
        _
      $region10: #{tpu_custom_call.1} parent=5 // pred_check_branch
        %318 = sbr.rel (%p315) target = $region12
      $region11: #{tpu_custom_call.1} parent=5 // pred_region
        %s319 = ssub.s32 %s38, 1
        // Predicated region
        $region13: #{tpu_custom_call.1} parent=11 // pred_check
          %p320 = pneg %p59
        $region14: #{tpu_custom_call.1} parent=11 // pred_check_branch
          %322 = sbr.rel (%p320) target = $region16
        $region15: #{tpu_custom_call.1} parent=11 // pred_region
          %s324 = ssub.s32 256, 256
          %325 = vsyncadd [#allocation7], %s324
          %s326 = sshll.u32 [#allocation6], 4
          %s327 = int_to_ptr.vmem [resolvable:$true] %s326
          %332 = dma.hbm_to_vmem [thread:$0]  %s1, 256, %s327, [#allocation7], 128, 128, 8
        $region16: #{tpu_custom_call.1} parent=11 // pred_fallthru
          _
        // Predicated region
        $region17: #{tpu_custom_call.1} parent=11 // pred_check
          %p333 = pneg %p106
        $region18: #{tpu_custom_call.1} parent=11 // pred_check_branch
          %335 = sbr.rel (%p333) target = $region20
        $region19: #{tpu_custom_call.1} parent=11 // pred_region
          %s337 = ssub.s32 1024, 1024
          %338 = vsyncadd [#allocation10], %s337
          %s339 = sshll.u32 [#allocation11], 4
          %s340 = int_to_ptr.vmem [resolvable:$true] %s339
          %345 = dma.hbm_to_vmem [thread:$0]  %s3, 1024, %s340, [#allocation10], 64, 64, 4
        $region20: #{tpu_custom_call.1} parent=11 // pred_fallthru
          _
        // Predicated region
        $region21: #{tpu_custom_call.1} parent=11 // pred_check
          %p346 = pneg %p127
        $region22: #{tpu_custom_call.1} parent=11 // pred_check_branch
          %348 = sbr.rel (%p346) target = $region24
        $region23: #{tpu_custom_call.1} parent=11 // pred_region
          %s350 = ssub.s32 1024, 1024
          %351 = vsyncadd [#allocation13], %s350
          %s352 = sshll.u32 [#allocation12], 4
          %s353 = int_to_ptr.vmem [resolvable:$true] %s352
          %358 = dma.hbm_to_vmem [thread:$0]  %s4, 1024, %s353, [#allocation13], 64, 64, 4
        $region24: #{tpu_custom_call.1} parent=11 // pred_fallthru
          _
        // Predicated region
        $region25: #{tpu_custom_call.1} parent=11 // pred_check
          %p359 = pneg %p148
        $region26: #{tpu_custom_call.1} parent=11 // pred_check_branch
          %361 = sbr.rel (%p359) target = $region28
        $region27: #{tpu_custom_call.1} parent=11 // pred_region
          _
        $region28: #{tpu_custom_call.1} parent=11 // pred_fallthru
          _
        // Predicated region
        $region29: #{tpu_custom_call.1} parent=11 // pred_check
          %p362 = pneg %p169
        $region30: #{tpu_custom_call.1} parent=11 // pred_check_branch
          %364 = sbr.rel (%p362) target = $region32
        $region31: #{tpu_custom_call.1} parent=11 // pred_region
          _
        $region32: #{tpu_custom_call.1} parent=11 // pred_fallthru
          _
        // Predicated region
        $region33: #{tpu_custom_call.1} parent=11 // pred_check
          %p365 = pneg %p190
        $region34: #{tpu_custom_call.1} parent=11 // pred_check_branch
          %367 = sbr.rel (%p365) target = $region36
        $region35: #{tpu_custom_call.1} parent=11 // pred_region
          %s369 = ssub.s32 1024, 1024
          %370 = vsyncadd [#allocation13], %s369
          %s371 = sshll.u32 [#allocation14], 4
          %s372 = int_to_ptr.vmem [resolvable:$true] %s371
          %377 = dma.hbm_to_vmem [thread:$0]  %s7, 1024, %s372, [#allocation13], 64, 64, 4
        $region36: #{tpu_custom_call.1} parent=11 // pred_fallthru
          _
        // Predicated region
        $region37: #{tpu_custom_call.1} parent=11 // pred_check
          %p378 = pneg %p211
        $region38: #{tpu_custom_call.1} parent=11 // pred_check_branch
          %380 = sbr.rel (%p378) target = $region40
        $region39: #{tpu_custom_call.1} parent=11 // pred_region
          _
        $region40: #{tpu_custom_call.1} parent=11 // pred_fallthru
          _
        // Predicated region
        $region41: #{tpu_custom_call.1} parent=11 // pred_check
          %p381 = pneg %p232
        $region42: #{tpu_custom_call.1} parent=11 // pred_check_branch
          %383 = sbr.rel (%p381) target = $region44
        $region43: #{tpu_custom_call.1} parent=11 // pred_region
          _
        $region44: #{tpu_custom_call.1} parent=11 // pred_fallthru
          _
        // Predicated region
        $region45: #{tpu_custom_call.1} parent=11 // pred_check
          %p384 = pneg %p253
        $region46: #{tpu_custom_call.1} parent=11 // pred_check_branch
          %386 = sbr.rel (%p384) target = $region48
        $region47: #{tpu_custom_call.1} parent=11 // pred_region
          _
        $region48: #{tpu_custom_call.1} parent=11 // pred_fallthru
          _
      $region12: #{tpu_custom_call.1} parent=5 // pred_fallthru
        _
      %p387 = scmp.lt.s32.totalorder %s38, 3
      // Predicated region
      $region49: #{tpu_custom_call.1} parent=5 // pred_check
        %p388 = pneg %p387
      $region50: #{tpu_custom_call.1} parent=5 // pred_check_branch
        %390 = sbr.rel (%p388) target = $region52
      $region51: #{tpu_custom_call.1} parent=5 // pred_region
        // Predicated region
        $region53: #{tpu_custom_call.1} parent=51 // pred_check
          %p391 = pneg %p79
        $region54: #{tpu_custom_call.1} parent=51 // pred_check_branch
          %393 = sbr.rel (%p391) target = $region56
        $region55: #{tpu_custom_call.1} parent=51 // pred_region
          %s394 = sand.u32 %s38, 1
          %s395 = scalar_lea.sflag [#allocation10], %s394
          %s396 = sand.u32 %s69, 1
          %s397 = smul.addr %s396, 4
          %s398 = scalar_lea.vmem [#allocation9], %s397
          %s400 = ssub.s32 64, 64
          %401 = vsyncadd %s395, %s400
          %s402 = smul.addr %s38, 64
          %s403 = scalar_lea.hbm %s2, %s402
          %s405 = sshll.u32 %s398, 4
          %s406 = int_to_ptr.vmem [resolvable:$true] %s405
          %408 = dma.hbm_to_vmem [thread:$0]  %s403, 64, %s406, %s395
        $region56: #{tpu_custom_call.1} parent=51 // pred_fallthru
          _
      $region52: #{tpu_custom_call.1} parent=5 // pred_fallthru
        _
      %p409 = scmp.le.s32.totalorder 1, %s38
      %p410 = scmp.lt.s32.totalorder %s38, 4
      %p411 = pnand %p409, %p410
      %p412 = pneg %p411
      // Predicated region
      $region57: #{tpu_custom_call.1} parent=5 // pred_check
        _
      $region58: #{tpu_custom_call.1} parent=5 // pred_check_branch
        %414 = sbr.rel (%p411) target = $region60
      $region59: #{tpu_custom_call.1} parent=5 // pred_region
        %s415 = ssub.s32 %s38, 1
        // Predicated region
        $region61: #{tpu_custom_call.1} parent=59 // pred_check
          %p416 = pneg %p59
        $region62: #{tpu_custom_call.1} parent=59 // pred_check_branch
          %418 = sbr.rel (%p416) target = $region64
        $region63: #{tpu_custom_call.1} parent=59 // pred_region
          %419 = dma.done [#allocation7], 256
        $region64: #{tpu_custom_call.1} parent=59 // pred_fallthru
          _
        %s420 = sand.u32 %s43, 1
        %s421 = scalar_lea.sflag [#allocation10], %s420
        %s422 = sand.u32 %s72, 1
        %s423 = smul.addr %s422, 4
        %s424 = scalar_lea.vmem [#allocation9], %s423
        // Predicated region
        $region65: #{tpu_custom_call.1} parent=59 // pred_check
          %p425 = pneg %p85
        $region66: #{tpu_custom_call.1} parent=59 // pred_check_branch
          %427 = sbr.rel (%p425) target = $region68
        $region67: #{tpu_custom_call.1} parent=59 // pred_region
          %428 = dma.done %s421, 64
        $region68: #{tpu_custom_call.1} parent=59 // pred_fallthru
          _
        // Predicated region
        $region69: #{tpu_custom_call.1} parent=59 // pred_check
          %p429 = pneg %p106
        $region70: #{tpu_custom_call.1} parent=59 // pred_check_branch
          %431 = sbr.rel (%p429) target = $region72
        $region71: #{tpu_custom_call.1} parent=59 // pred_region
          %432 = dma.done [#allocation10], 1024
        $region72: #{tpu_custom_call.1} parent=59 // pred_fallthru
          _
        // Predicated region
        $region73: #{tpu_custom_call.1} parent=59 // pred_check
          %p433 = pneg %p127
        $region74: #{tpu_custom_call.1} parent=59 // pred_check_branch
          %435 = sbr.rel (%p433) target = $region76
        $region75: #{tpu_custom_call.1} parent=59 // pred_region
          %436 = dma.done [#allocation13], 1024
        $region76: #{tpu_custom_call.1} parent=59 // pred_fallthru
          _
        // Predicated region
        $region77: #{tpu_custom_call.1} parent=59 // pred_check
          %p437 = pneg %p190
        $region78: #{tpu_custom_call.1} parent=59 // pred_check_branch
          %439 = sbr.rel (%p437) target = $region80
        $region79: #{tpu_custom_call.1} parent=59 // pred_region
          %440 = dma.done [#allocation13], 1024
        $region80: #{tpu_custom_call.1} parent=59 // pred_fallthru
          _
        %p441 = pneg %p59
        %p442 = pneg %p56
        %s443 = sand.u32 %s43, 1
        %s444 = scalar_lea.sflag [#allocation10], %s443
        %s445 = sand.u32 %s72, 1
        %s446 = smul.addr %s445, 4
        %s447 = scalar_lea.vmem [#allocation9], %s446
        %p448 = pneg %p85
        %p449 = pneg %p82
        %p450 = pneg %p106
        %p451 = pneg %p103
        %p452 = pneg %p127
        %p453 = pneg %p124
        %p454 = pneg %p148
        %p455 = pneg %p145
        %p456 = pneg %p169
        %p457 = pneg %p166
        %p458 = pneg %p190
        %p459 = pneg %p187
        %p460 = pneg %p211
        %p461 = pneg %p208
        %p462 = pneg %p232
        %p463 = pneg %p229
        %p464 = pneg %p253
        %p465 = pneg %p250
        %p466 = pneg %p279
        %p467 = pneg %p276
        %s468 = sand.u32 %s266, 1
        %s469 = scalar_lea.sflag [#allocation8], %s468
        %s470 = sand.u32 %s266, 1
        %s471 = smul.addr %s470, 16
        %s472 = scalar_lea.vmem [#allocation15], %s471
        %p473 = pneg %p305
        %p474 = pneg %p302
        %s475 = sand.u32 %s292, 1
        %s476 = scalar_lea.sflag [#allocation17], %s475
        %s477 = sand.u32 %s292, 1
        %s478 = smul.addr %s477, 8
        %s479 = scalar_lea.vmem [#allocation16], %s478
        %p481 = scmp.eq.s32.totalorder %s43, 0
        // Predicated region
        $region81: #{tpu_custom_call.1} parent=59 // pred_check
          %p482 = pneg %p481
        $region82: #{tpu_custom_call.1} parent=59 // pred_check_branch
          %484 = sbr.rel (%p482) target = $region84
        $region83: #{tpu_custom_call.1} parent=59 // pred_region
          %v485 = vld [vmem:[#allocation6] sm:$0xff]
          %v486 = vld [vmem:[#allocation6 + $0x8] sm:$0xff]
          %487 = vst [vmem:[#allocation2] sm:$0xff] %v485
          %488 = vst [vmem:[#allocation2 + $0x8] sm:$0xff] %v486
        $region84: #{tpu_custom_call.1} parent=59 // pred_fallthru
          _
        %v489 = vld [vmem:[#allocation2] sm:$0xff]
        %v490 = vld [vmem:[#allocation2 + $0x8] sm:$0xff]
        %v491 = vld [vmem:[%s424] sm:$0xf]
        %v492 = vunpack.c.l.bf16 %v491
        %s493 = sld [smem:[#allocation4 + %s43]]
        %v494 = vlaneseq
        %v495 = vshrl.u32 %v494, 7
        %v496 = vstv %s493
        %vm497 = vcmp.lt.s32.totalorder %v495, %v496
        %vm498 = vcmask 130048
        %v499 = vsel %vm498, %v492, -inf
        %500 = vmax.xlane.f32.xlu0 %v499
        %v501 = vpop.xlane.xlu0 %500
        %v502 = vrot.slane %v501, 4
        %v503 = vmax.f32 %v501, %v502
        %v504 = vrot.slane %v503, 2
        %v505 = vmax.f32 %v503, %v504
        %v506 = vrot.slane %v505, 1
        %v507 = vmax.f32 %v505, %v506
        %s508 = vtos %v507
        %v509 = vstv %s508
        %v510 = vsub.f32 %v492, %v509
        %v511 = vmul.f32 %v510, 1.442695
        %v512 = vpow.pop %v511
        %v513 = vsel %vm497, %v512, 0.0
        %v514 = vsel %vm498, %v513, 0.0
        %515 = vadd.xlane.f32.xlu0 %v514
        %v516 = vpop.xlane.xlu0 %515
        %v517 = vrcp.pop %v516
        %v518 = vmul.f32 %v513, %v517
        %v519 = vsel %vm497, %v518, 0.0
        %v520 = vrot.slane %v514, 4
        %v521 = vadd.f32 %v514, %v520
        %v522 = vrot.slane %v521, 2
        %v523 = vadd.f32 %v521, %v522
        %v524 = vrot.slane %v523, 1
        %v525 = vadd.f32 %v523, %v524
        %v526 = vrcp.pop %v525
        %v527 = vmul.f32 %v513, %v526
        %v528 = vpack.c.bf16 %v490, %v489
        %v529 = vld [vmem:[#allocation11] sm:$0xf]
        %v530 = vld [vmem:[#allocation11 + $0x4] sm:$0xf]
        %v531 = vld [vmem:[#allocation11 + $0x8] sm:$0xf]
        %v532 = vld [vmem:[#allocation11 + $0xc] sm:$0xf]
        %v533 = vld [vmem:[#allocation11 + $0x10] sm:$0xf]
        %v534 = vld [vmem:[#allocation11 + $0x14] sm:$0xf]
        %v535 = vld [vmem:[#allocation11 + $0x18] sm:$0xf]
        %v536 = vld [vmem:[#allocation11 + $0x1c] sm:$0xf]
        %v537 = vld [vmem:[#allocation11 + $0x20] sm:$0xf]
        %v538 = vld [vmem:[#allocation11 + $0x24] sm:$0xf]
        %v539 = vld [vmem:[#allocation11 + $0x28] sm:$0xf]
        %v540 = vld [vmem:[#allocation11 + $0x2c] sm:$0xf]
        %v541 = vld [vmem:[#allocation11 + $0x30] sm:$0xf]
        %v542 = vld [vmem:[#allocation11 + $0x34] sm:$0xf]
        %v543 = vld [vmem:[#allocation11 + $0x38] sm:$0xf]
        %v544 = vld [vmem:[#allocation11 + $0x3c] sm:$0xf]
        %v561 = vunpack.c.l.b16 %v529
        %v562 = vunpack.c.l.b16 %v530
        %v563 = vunpack.c.l.b16 %v531
        %v564 = vunpack.c.l.b16 %v532
        %v565 = vunpack.c.l.b16 %v533
        %v566 = vunpack.c.l.b16 %v534
        %v567 = vunpack.c.l.b16 %v535
        %v568 = vunpack.c.l.b16 %v536
        %v569 = vunpack.c.l.b16 %v537
        %v570 = vunpack.c.l.b16 %v538
        %v571 = vunpack.c.l.b16 %v539
        %v572 = vunpack.c.l.b16 %v540
        %v573 = vunpack.c.l.b16 %v541
        %v574 = vunpack.c.l.b16 %v542
        %v575 = vunpack.c.l.b16 %v543
        %v576 = vunpack.c.l.b16 %v544
        %v577 = vpack.c.b16 %v562, %v561
        %v578 = vpack.c.b16 %v564, %v563
        %v579 = vpack.c.b16 %v566, %v565
        %v580 = vpack.c.b16 %v568, %v567
        %v581 = vpack.c.b16 %v570, %v569
        %v582 = vpack.c.b16 %v572, %v571
        %v583 = vpack.c.b16 %v574, %v573
        %v584 = vpack.c.b16 %v576, %v575
        %593 = vmatprep.subr.bf16.mxu0 0
        %594 = vmatpush1.bf16.msra.mxu0 %v577
        %595 = vmatprep.subr.bf16.mxu0 0
        %596 = vmatpush1.bf16.msra.mxu0 %v578
        %597 = vmatprep.subr.bf16.mxu0 0
        %598 = vmatpush1.bf16.msra.mxu0 %v579
        %599 = vmatprep.subr.bf16.mxu0 0
        %600 = vmatpush1.bf16.msra.mxu0 %v580
        %601 = vmatprep.subr.bf16.mxu0 0
        %602 = vmatpush1.bf16.msra.mxu0 %v581
        %603 = vmatprep.subr.bf16.mxu0 0
        %604 = vmatpush1.bf16.msra.mxu0 %v582
        %605 = vmatprep.subr.bf16.mxu0 0
        %606 = vmatpush1.bf16.msra.mxu0 %v583
        %607 = vmatprep.subr.bf16.mxu0 0
        %608 = vmatpush1.bf16.msra.mxu0 %v584
        %609 = vmatprep.subr.bf16.mxu0 0
        %610 = vmatpush1.bf16.msra.mxu0 0
        %611 = vmatprep.subr.bf16.mxu0 0
        %612 = vmatpush1.bf16.msra.mxu0 0
        %613 = vmatprep.subr.bf16.mxu0 0
        %614 = vmatpush1.bf16.msra.mxu0 0
        %615 = vmatprep.subr.bf16.mxu0 0
        %616 = vmatpush1.bf16.msra.mxu0 0
        %617 = vmatprep.subr.bf16.mxu0 0
        %618 = vmatpush1.bf16.msra.mxu0 0
        %619 = vmatprep.subr.bf16.mxu0 0
        %620 = vmatpush1.bf16.msra.mxu0 0
        %621 = vmatprep.subr.bf16.mxu0 0
        %622 = vmatpush1.bf16.msra.mxu0 0
        %623 = vmatprep.subr.bf16.mxu0 0
        %624 = vmatpush1.bf16.msra.mxu0 0
        %625 = vmatprep.mubr.bf16.mxu0 0
        %626 = vmatmul.mubr.bf16.gmra.mrb[0].mxu0 %v528
        %v627 = vpop.f32.mrb[0].mxu0
        %v628 = vadd.f32 0.0, %v627
        %v629 = vpop.f32.mrb[0].mxu0
        %v630 = vpop.f32.mrb[0].mxu0
        %v631 = vadd.f32 0.0, %v630
        %v632 = vpop.f32.mrb[0].mxu0
        %633 = vdwg.mxu0
        %v634 = vpack.c.bf16 %v519, %v519
        %v635 = vpack.c.bf16 %v631, %v628
        %v637 = vsel %vm498, %v634, 0
        %639 = vmatprep.subr.bf16.mxu0 0
        %640 = vmatpush1.bf16.msra.mxu0 %v635
        %641 = vmatprep.subr.bf16.mxu0 0
        %642 = vmatpush1.bf16.msra.mxu0 0
        %643 = vmatprep.subr.bf16.mxu0 0
        %644 = vmatpush1.bf16.msra.mxu0 0
        %645 = vmatprep.subr.bf16.mxu0 0
        %646 = vmatpush1.bf16.msra.mxu0 0
        %647 = vmatprep.subr.bf16.mxu0 0
        %648 = vmatpush1.bf16.msra.mxu0 0
        %649 = vmatprep.subr.bf16.mxu0 0
        %650 = vmatpush1.bf16.msra.mxu0 0
        %651 = vmatprep.subr.bf16.mxu0 0
        %652 = vmatpush1.bf16.msra.mxu0 0
        %653 = vmatprep.subr.bf16.mxu0 0
        %654 = vmatpush1.bf16.msra.mxu0 0
        %655 = vmatprep.subr.bf16.mxu0 0
        %656 = vmatpush1.bf16.msra.mxu0 0
        %657 = vmatprep.subr.bf16.mxu0 0
        %658 = vmatpush1.bf16.msra.mxu0 0
        %659 = vmatprep.subr.bf16.mxu0 0
        %660 = vmatpush1.bf16.msra.mxu0 0
        %661 = vmatprep.subr.bf16.mxu0 0
        %662 = vmatpush1.bf16.msra.mxu0 0
        %663 = vmatprep.subr.bf16.mxu0 0
        %664 = vmatpush1.bf16.msra.mxu0 0
        %665 = vmatprep.subr.bf16.mxu0 0
        %666 = vmatpush1.bf16.msra.mxu0 0
        %667 = vmatprep.subr.bf16.mxu0 0
        %668 = vmatpush1.bf16.msra.mxu0 0
        %669 = vmatprep.subr.bf16.mxu0 0
        %670 = vmatpush1.bf16.msra.mxu0 0
        %671 = vmatprep.mubr.bf16.mxu0 0
        %672 = vmatmul.mubr.bf16.gmra.mrb[0].mxu0 %v637
        %v673 = vpop.f32.mrb[0].mxu0
        %v674 = vadd.f32 0.0, %v673
        %v675 = vpop.f32.mrb[0].mxu0
        %v676 = vpop.f32.mrb[0].mxu0
        %v677 = vpop.f32.mrb[0].mxu0
        %678 = vdwg.mxu0
        %v679 = vmax.f32 %v674, 0.0
        %v680 = vpack.c.bf16 %v679, %v679
        %v681 = vld [vmem:[#allocation12] sm:$0xf]
        %v682 = vld [vmem:[#allocation12 + $0x4] sm:$0xf]
        %v683 = vld [vmem:[#allocation12 + $0x8] sm:$0xf]
        %v684 = vld [vmem:[#allocation12 + $0xc] sm:$0xf]
        %v685 = vld [vmem:[#allocation12 + $0x10] sm:$0xf]
        %v686 = vld [vmem:[#allocation12 + $0x14] sm:$0xf]
        %v687 = vld [vmem:[#allocation12 + $0x18] sm:$0xf]
        %v688 = vld [vmem:[#allocation12 + $0x1c] sm:$0xf]
        %v689 = vld [vmem:[#allocation12 + $0x20] sm:$0xf]
        %v690 = vld [vmem:[#allocation12 + $0x24] sm:$0xf]
        %v691 = vld [vmem:[#allocation12 + $0x28] sm:$0xf]
        %v692 = vld [vmem:[#allocation12 + $0x2c] sm:$0xf]
        %v693 = vld [vmem:[#allocation12 + $0x30] sm:$0xf]
        %v694 = vld [vmem:[#allocation12 + $0x34] sm:$0xf]
        %v695 = vld [vmem:[#allocation12 + $0x38] sm:$0xf]
        %v696 = vld [vmem:[#allocation12 + $0x3c] sm:$0xf]
        %v713 = vunpack.c.l.b16 %v681
        %v714 = vunpack.c.l.b16 %v682
        %v715 = vunpack.c.l.b16 %v683
        %v716 = vunpack.c.l.b16 %v684
        %v717 = vunpack.c.l.b16 %v685
        %v718 = vunpack.c.l.b16 %v686
        %v719 = vunpack.c.l.b16 %v687
        %v720 = vunpack.c.l.b16 %v688
        %v721 = vunpack.c.l.b16 %v689
        %v722 = vunpack.c.l.b16 %v690
        %v723 = vunpack.c.l.b16 %v691
        %v724 = vunpack.c.l.b16 %v692
        %v725 = vunpack.c.l.b16 %v693
        %v726 = vunpack.c.l.b16 %v694
        %v727 = vunpack.c.l.b16 %v695
        %v728 = vunpack.c.l.b16 %v696
        %v729 = vpack.c.b16 %v714, %v713
        %v730 = vpack.c.b16 %v716, %v715
        %v731 = vpack.c.b16 %v718, %v717
        %v732 = vpack.c.b16 %v720, %v719
        %v733 = vpack.c.b16 %v722, %v721
        %v734 = vpack.c.b16 %v724, %v723
        %v735 = vpack.c.b16 %v726, %v725
        %v736 = vpack.c.b16 %v728, %v727
        %745 = vmatprep.subr.bf16.mxu0 0
        %746 = vmatpush1.bf16.msra.mxu0 %v729
        %747 = vmatprep.subr.bf16.mxu0 0
        %748 = vmatpush1.bf16.msra.mxu0 %v730
        %749 = vmatprep.subr.bf16.mxu0 0
        %750 = vmatpush1.bf16.msra.mxu0 %v731
        %751 = vmatprep.subr.bf16.mxu0 0
        %752 = vmatpush1.bf16.msra.mxu0 %v732
        %753 = vmatprep.subr.bf16.mxu0 0
        %754 = vmatpush1.bf16.msra.mxu0 %v733
        %755 = vmatprep.subr.bf16.mxu0 0
        %756 = vmatpush1.bf16.msra.mxu0 %v734
        %757 = vmatprep.subr.bf16.mxu0 0
        %758 = vmatpush1.bf16.msra.mxu0 %v735
        %759 = vmatprep.subr.bf16.mxu0 0
        %760 = vmatpush1.bf16.msra.mxu0 %v736
        %761 = vmatprep.subr.bf16.mxu0 0
        %762 = vmatpush1.bf16.msra.mxu0 0
        %763 = vmatprep.subr.bf16.mxu0 0
        %764 = vmatpush1.bf16.msra.mxu0 0
        %765 = vmatprep.subr.bf16.mxu0 0
        %766 = vmatpush1.bf16.msra.mxu0 0
        %767 = vmatprep.subr.bf16.mxu0 0
        %768 = vmatpush1.bf16.msra.mxu0 0
        %769 = vmatprep.subr.bf16.mxu0 0
        %770 = vmatpush1.bf16.msra.mxu0 0
        %771 = vmatprep.subr.bf16.mxu0 0
        %772 = vmatpush1.bf16.msra.mxu0 0
        %773 = vmatprep.subr.bf16.mxu0 0
        %774 = vmatpush1.bf16.msra.mxu0 0
        %775 = vmatprep.subr.bf16.mxu0 0
        %776 = vmatpush1.bf16.msra.mxu0 0
        %777 = vmatprep.mubr.bf16.mxu0 0
        %778 = vmatmul.mubr.bf16.gmra.mrb[0].mxu0 %v680
        %v779 = vpop.f32.mrb[0].mxu0
        %v780 = vadd.f32 0.0, %v779
        %v781 = vpop.f32.mrb[0].mxu0
        %v782 = vpop.f32.mrb[0].mxu0
        %v783 = vpop.f32.mrb[0].mxu0
        %784 = vdwg.mxu0
        %v785 = vpack.c.bf16 %v527, %v527
        %v786 = vpack.c.bf16 %v780, %v780
        %787 = vxpose.xlu0.c.b16.start [1/8] %v785, 128
        %788 = vxpose.xlu0.c.b16.cont [2/8] 0, 128
        %789 = vxpose.xlu0.c.b16.cont [3/8] 0, 128
        %790 = vxpose.xlu0.c.b16.cont [4/8] 0, 128
        %791 = vxpose.xlu0.c.b16.cont [5/8] 0, 128
        %792 = vxpose.xlu0.c.b16.cont [6/8] 0, 128
        %793 = vxpose.xlu0.c.b16.cont [7/8] 0, 128
        %794 = vxpose.xlu0.c.b16.end [8/8] 0, 128
        %v795 = vpop.trf.xlu0
        %v796 = vpop.trf.xlu0
        %v797 = vpop.trf.xlu0
        %v798 = vpop.trf.xlu0
        %v799 = vpop.trf.xlu0
        %v800 = vpop.trf.xlu0
        %v801 = vpop.trf.xlu0
        %v802 = vpop.trf.xlu0
        %vm803 = vcmask 64512
        %v805 = vsel %vm803, %v795, 0
        %vm807 = vcmask 1043456
        %v809 = vsel %vm807, %v786, 0
        %811 = vmatprep.subr.bf16.mxu0 0
        %812 = vmatpush1.bf16.msra.mxu0 %v809
        %813 = vmatprep.subr.bf16.mxu0 0
        %814 = vmatpush1.bf16.msra.mxu0 0
        %815 = vmatprep.subr.bf16.mxu0 0
        %816 = vmatpush1.bf16.msra.mxu0 0
        %817 = vmatprep.subr.bf16.mxu0 0
        %818 = vmatpush1.bf16.msra.mxu0 0
        %819 = vmatprep.subr.bf16.mxu0 0
        %820 = vmatpush1.bf16.msra.mxu0 0
        %821 = vmatprep.subr.bf16.mxu0 0
        %822 = vmatpush1.bf16.msra.mxu0 0
        %823 = vmatprep.subr.bf16.mxu0 0
        %824 = vmatpush1.bf16.msra.mxu0 0
        %825 = vmatprep.subr.bf16.mxu0 0
        %826 = vmatpush1.bf16.msra.mxu0 0
        %827 = vmatprep.subr.bf16.mxu0 0
        %828 = vmatpush1.bf16.msra.mxu0 0
        %829 = vmatprep.subr.bf16.mxu0 0
        %830 = vmatpush1.bf16.msra.mxu0 0
        %831 = vmatprep.subr.bf16.mxu0 0
        %832 = vmatpush1.bf16.msra.mxu0 0
        %833 = vmatprep.subr.bf16.mxu0 0
        %834 = vmatpush1.bf16.msra.mxu0 0
        %835 = vmatprep.subr.bf16.mxu0 0
        %836 = vmatpush1.bf16.msra.mxu0 0
        %837 = vmatprep.subr.bf16.mxu0 0
        %838 = vmatpush1.bf16.msra.mxu0 0
        %839 = vmatprep.subr.bf16.mxu0 0
        %840 = vmatpush1.bf16.msra.mxu0 0
        %841 = vmatprep.subr.bf16.mxu0 0
        %842 = vmatpush1.bf16.msra.mxu0 0
        %843 = vmatprep.mubr.bf16.mxu0 0
        %844 = vmatmul.mubr.bf16.gmra.mrb[0].mxu0 %v805
        %v845 = vpop.f32.mrb[0].mxu0
        %v846 = vadd.f32 0.0, %v845
        %v847 = vpop.f32.mrb[0].mxu0
        %v848 = vpop.f32.mrb[0].mxu0
        %v849 = vadd.f32 0.0, %v848
        %v850 = vpop.f32.mrb[0].mxu0
        %851 = vdwg.mxu0
        %v852 = vmax.f32 %v846, 0.0
        %v853 = vmax.f32 %v849, 0.0
        %v854 = vpack.c.bf16 %v853, %v852
        %855 = vmatprep.subr.bf16.mxu0 0
        %856 = vmatpush1.bf16.msra.mxu0 %v854
        %857 = vmatprep.subr.bf16.mxu0 0
        %858 = vmatpush1.bf16.msra.mxu0 0
        %859 = vmatprep.subr.bf16.mxu0 0
        %860 = vmatpush1.bf16.msra.mxu0 0
        %861 = vmatprep.subr.bf16.mxu0 0
        %862 = vmatpush1.bf16.msra.mxu0 0
        %863 = vmatprep.subr.bf16.mxu0 0
        %864 = vmatpush1.bf16.msra.mxu0 0
        %865 = vmatprep.subr.bf16.mxu0 0
        %866 = vmatpush1.bf16.msra.mxu0 0
        %867 = vmatprep.subr.bf16.mxu0 0
        %868 = vmatpush1.bf16.msra.mxu0 0
        %869 = vmatprep.subr.bf16.mxu0 0
        %870 = vmatpush1.bf16.msra.mxu0 0
        %871 = vmatprep.subr.bf16.mxu0 0
        %872 = vmatpush1.bf16.msra.mxu0 0
        %873 = vmatprep.subr.bf16.mxu0 0
        %874 = vmatpush1.bf16.msra.mxu0 0
        %875 = vmatprep.subr.bf16.mxu0 0
        %876 = vmatpush1.bf16.msra.mxu0 0
        %877 = vmatprep.subr.bf16.mxu0 0
        %878 = vmatpush1.bf16.msra.mxu0 0
        %879 = vmatprep.subr.bf16.mxu0 0
        %880 = vmatpush1.bf16.msra.mxu0 0
        %881 = vmatprep.subr.bf16.mxu0 0
        %882 = vmatpush1.bf16.msra.mxu0 0
        %883 = vmatprep.subr.bf16.mxu0 0
        %884 = vmatpush1.bf16.msra.mxu0 0
        %885 = vmatprep.subr.bf16.mxu0 0
        %886 = vmatpush1.bf16.msra.mxu0 0
        %887 = vmatprep.mubr.bf16.mxu0 0
        %888 = vmatmul.mubr.bf16.gmra.mrb[0].mxu0 %v637
        %v889 = vpop.f32.mrb[0].mxu0
        %v890 = vadd.f32 0.0, %v889
        %v891 = vpop.f32.mrb[0].mxu0
        %v892 = vpop.f32.mrb[0].mxu0
        %v893 = vpop.f32.mrb[0].mxu0
        %894 = vdwg.mxu0
        %v895 = vmax.f32 %v890, 0.0
        %v896 = vld [vmem:[%s5] sm:$0x1]
        %v897 = vld [vmem:[%s6] sm:$0x1]
        %v898 = vadd.f32 %v852, %v853
        %v899 = vrot.slane %v898, 4
        %v900 = vadd.f32 %v898, %v899
        %v901 = vrot.slane %v900, 2
        %v902 = vadd.f32 %v900, %v901
        %v903 = vrot.slane %v902, 1
        %v904 = vadd.f32 %v902, %v903
        %v905 = vmul.f32 %v904, 0.0625
        %v906 = vmul.f32 %v852, %v852
        %v907 = vmul.f32 %v853, %v853
        %v908 = vadd.f32 %v906, %v907
        %v909 = vrot.slane %v908, 4
        %v910 = vadd.f32 %v908, %v909
        %v911 = vrot.slane %v910, 2
        %v912 = vadd.f32 %v910, %v911
        %v913 = vrot.slane %v912, 1
        %v914 = vadd.f32 %v912, %v913
        %v915 = vmul.f32 %v914, 0.0625
        %v916 = vmul.f32 %v905, %v905
        %v917 = vsub.f32 %v915, %v916
        %v918 = vmax.f32 %v917, 0.0
        %v919 = vsub.f32 %v852, %v905
        %v920 = vsub.f32 %v853, %v905
        %v921 = vadd.f32 %v918, 1e-05
        %v922 = vrsqrt.pop %v921
        %v923 = vmul.f32 %v919, %v922
        %v924 = vmul.f32 %v920, %v922
        %v926 = vlaneseq
        %v927 = vshrl.u32 %v926, 7
        %v928 = vsub.s32 0, %v927
        %v929 = vrot.slane %v896, %v928
        %v931 = vmul.f32 %v923, %v929
        %v932 = vmul.f32 %v924, %v929
        %v934 = vlaneseq
        %v935 = vshrl.u32 %v934, 7
        %v936 = vsub.s32 0, %v935
        %v937 = vrot.slane %v897, %v936
        %v939 = vadd.f32 %v931, %v937
        %v940 = vadd.f32 %v932, %v937
        %s941 = scvt.s32.f32 %s493
        %v942 = vstv %s941
        %v943 = vrcp.pop %v942
        %s944 = vtos %v943
        %v945 = vrot.slane %v895, 4
        %v946 = vadd.f32 %v895, %v945
        %v947 = vrot.slane %v946, 2
        %v948 = vadd.f32 %v946, %v947
        %v949 = vrot.slane %v948, 1
        %v950 = vadd.f32 %v948, %v949
        %v951 = vstv %s944
        %v952 = vmul.f32 %v950, %v951
        %v953 = vmul.f32 %v895, %v895
        %v954 = vrot.slane %v953, 4
        %v955 = vadd.f32 %v953, %v954
        %v956 = vrot.slane %v955, 2
        %v957 = vadd.f32 %v955, %v956
        %v958 = vrot.slane %v957, 1
        %v959 = vadd.f32 %v957, %v958
        %v960 = vmul.f32 %v959, %v951
        %v961 = vmul.f32 %v952, %v952
        %v962 = vsub.f32 %v960, %v961
        %v963 = vmax.f32 %v962, 0.0
        %v964 = vsub.f32 %v895, %v952
        %v965 = vadd.f32 %v963, 1e-05
        %v966 = vrsqrt.pop %v965
        %v967 = vmul.f32 %v964, %v966
        %v968 = vmul.f32 %v967, %v929
        %v969 = vadd.f32 %v968, %v937
        %v970 = vld [vmem:[#allocation14] sm:$0xf]
        %v971 = vld [vmem:[#allocation14 + $0x4] sm:$0xf]
        %v972 = vld [vmem:[#allocation14 + $0x8] sm:$0xf]
        %v973 = vld [vmem:[#allocation14 + $0xc] sm:$0xf]
        %v974 = vld [vmem:[#allocation14 + $0x10] sm:$0xf]
        %v975 = vld [vmem:[#allocation14 + $0x14] sm:$0xf]
        %v976 = vld [vmem:[#allocation14 + $0x18] sm:$0xf]
        %v977 = vld [vmem:[#allocation14 + $0x1c] sm:$0xf]
        %v978 = vld [vmem:[#allocation14 + $0x20] sm:$0xf]
        %v979 = vld [vmem:[#allocation14 + $0x24] sm:$0xf]
        %v980 = vld [vmem:[#allocation14 + $0x28] sm:$0xf]
        %v981 = vld [vmem:[#allocation14 + $0x2c] sm:$0xf]
        %v982 = vld [vmem:[#allocation14 + $0x30] sm:$0xf]
        %v983 = vld [vmem:[#allocation14 + $0x34] sm:$0xf]
        %v984 = vld [vmem:[#allocation14 + $0x38] sm:$0xf]
        %v985 = vld [vmem:[#allocation14 + $0x3c] sm:$0xf]
        %v986 = vld [vmem:[%s8] sm:$0x1]
        %v987 = vld [vmem:[%s9] sm:$0x1]
        %v988 = vld [vmem:[#allocation5] sm:$0x1]
        %v990 = vlaneseq
        %v991 = vshrl.u32 %v990, 7
        %v992 = vsub.s32 0, %v991
        %v993 = vrot.slane %v986, %v992
        %v1011 = vunpack.c.l.b16 %v970
        %v1012 = vunpack.c.l.b16 %v971
        %v1013 = vunpack.c.l.b16 %v972
        %v1014 = vunpack.c.l.b16 %v973
        %v1015 = vunpack.c.l.b16 %v974
        %v1016 = vunpack.c.l.b16 %v975
        %v1017 = vunpack.c.l.b16 %v976
        %v1018 = vunpack.c.l.b16 %v977
        %v1019 = vunpack.c.l.b16 %v978
        %v1020 = vunpack.c.l.b16 %v979
        %v1021 = vunpack.c.l.b16 %v980
        %v1022 = vunpack.c.l.b16 %v981
        %v1023 = vunpack.c.l.b16 %v982
        %v1024 = vunpack.c.l.b16 %v983
        %v1025 = vunpack.c.l.b16 %v984
        %v1026 = vunpack.c.l.b16 %v985
        %v1027 = vpack.c.b16 %v1012, %v1011
        %v1028 = vpack.c.b16 %v1014, %v1013
        %v1029 = vpack.c.b16 %v1016, %v1015
        %v1030 = vpack.c.b16 %v1018, %v1017
        %v1031 = vpack.c.b16 %v1020, %v1019
        %v1032 = vpack.c.b16 %v1022, %v1021
        %v1033 = vpack.c.b16 %v1024, %v1023
        %v1034 = vpack.c.b16 %v1026, %v1025
        %1043 = vmatprep.subr.bf16.mxu0 0
        %1044 = vmatpush1.bf16.msra.mxu0 %v1027
        %1045 = vmatprep.subr.bf16.mxu0 0
        %1046 = vmatpush1.bf16.msra.mxu0 %v1028
        %1047 = vmatprep.subr.bf16.mxu0 0
        %1048 = vmatpush1.bf16.msra.mxu0 %v1029
        %1049 = vmatprep.subr.bf16.mxu0 0
        %1050 = vmatpush1.bf16.msra.mxu0 %v1030
        %1051 = vmatprep.subr.bf16.mxu0 0
        %1052 = vmatpush1.bf16.msra.mxu0 %v1031
        %1053 = vmatprep.subr.bf16.mxu0 0
        %1054 = vmatpush1.bf16.msra.mxu0 %v1032
        %1055 = vmatprep.subr.bf16.mxu0 0
        %1056 = vmatpush1.bf16.msra.mxu0 %v1033
        %1057 = vmatprep.subr.bf16.mxu0 0
        %1058 = vmatpush1.bf16.msra.mxu0 %v1034
        %1059 = vmatprep.subr.bf16.mxu0 0
        %1060 = vmatpush1.bf16.msra.mxu0 0
        %1061 = vmatprep.subr.bf16.mxu0 0
        %1062 = vmatpush1.bf16.msra.mxu0 0
        %1063 = vmatprep.subr.bf16.mxu0 0
        %1064 = vmatpush1.bf16.msra.mxu0 0
        %1065 = vmatprep.subr.bf16.mxu0 0
        %1066 = vmatpush1.bf16.msra.mxu0 0
        %1067 = vmatprep.subr.bf16.mxu0 0
        %1068 = vmatpush1.bf16.msra.mxu0 0
        %1069 = vmatprep.subr.bf16.mxu0 0
        %1070 = vmatpush1.bf16.msra.mxu0 0
        %1071 = vmatprep.subr.bf16.mxu0 0
        %1072 = vmatpush1.bf16.msra.mxu0 0
        %1073 = vmatprep.subr.bf16.mxu0 0
        %1074 = vmatpush1.bf16.msra.mxu0 0
        %1075 = vmatprep.mubr.bf16.mxu0 0
        %1076 = vmatmul.mubr.bf16.gmra.mrb[0].mxu0 %v528
        %v1077 = vpop.f32.mrb[0].mxu0
        %v1078 = vadd.f32 %v993, %v1077
        %v1079 = vpop.f32.mrb[0].mxu0
        %v1080 = vpop.f32.mrb[0].mxu0
        %v1081 = vadd.f32 %v993, %v1080
        %v1082 = vpop.f32.mrb[0].mxu0
        %1083 = vdwg.mxu0
        %v1084 = vtanh.pop %v1078
        %v1085 = vtanh.pop %v1081
        %v1086 = vpack.c.bf16 %v940, %v939
        %1087 = vmatprep.subr.bf16.mxu0 0
        %1088 = vmatpush1.bf16.msra.mxu0 %v1027
        %1089 = vmatprep.subr.bf16.mxu0 0
        %1090 = vmatpush1.bf16.msra.mxu0 %v1028
        %1091 = vmatprep.subr.bf16.mxu0 0
        %1092 = vmatpush1.bf16.msra.mxu0 %v1029
        %1093 = vmatprep.subr.bf16.mxu0 0
        %1094 = vmatpush1.bf16.msra.mxu0 %v1030
        %1095 = vmatprep.subr.bf16.mxu0 0
        %1096 = vmatpush1.bf16.msra.mxu0 %v1031
        %1097 = vmatprep.subr.bf16.mxu0 0
        %1098 = vmatpush1.bf16.msra.mxu0 %v1032
        %1099 = vmatprep.subr.bf16.mxu0 0
        %1100 = vmatpush1.bf16.msra.mxu0 %v1033
        %1101 = vmatprep.subr.bf16.mxu0 0
        %1102 = vmatpush1.bf16.msra.mxu0 %v1034
        %1103 = vmatprep.subr.bf16.mxu0 0
        %1104 = vmatpush1.bf16.msra.mxu0 0
        %1105 = vmatprep.subr.bf16.mxu0 0
        %1106 = vmatpush1.bf16.msra.mxu0 0
        %1107 = vmatprep.subr.bf16.mxu0 0
        %1108 = vmatpush1.bf16.msra.mxu0 0
        %1109 = vmatprep.subr.bf16.mxu0 0
        %1110 = vmatpush1.bf16.msra.mxu0 0
        %1111 = vmatprep.subr.bf16.mxu0 0
        %1112 = vmatpush1.bf16.msra.mxu0 0
        %1113 = vmatprep.subr.bf16.mxu0 0
        %1114 = vmatpush1.bf16.msra.mxu0 0
        %1115 = vmatprep.subr.bf16.mxu0 0
        %1116 = vmatpush1.bf16.msra.mxu0 0
        %1117 = vmatprep.subr.bf16.mxu0 0
        %1118 = vmatpush1.bf16.msra.mxu0 0
        %1119 = vmatprep.mubr.bf16.mxu0 0
        %1120 = vmatmul.mubr.bf16.gmra.mrb[0].mxu0 %v1086
        %v1121 = vpop.f32.mrb[0].mxu0
        %v1122 = vadd.f32 %v993, %v1121
        %v1123 = vpop.f32.mrb[0].mxu0
        %v1124 = vpop.f32.mrb[0].mxu0
        %v1125 = vadd.f32 %v993, %v1124
        %v1126 = vpop.f32.mrb[0].mxu0
        %1127 = vdwg.mxu0
        %v1128 = vtanh.pop %v1122
        %v1129 = vtanh.pop %v1125
        %v1131 = vlaneseq
        %v1132 = vshrl.u32 %v1131, 7
        %v1133 = vsub.s32 0, %v1132
        %v1134 = vrot.slane %v987, %v1133
        %v1136 = vmul.f32 %v1084, %v1134
        %v1137 = vmul.f32 %v1085, %v1134
        %1138 = vadd.xlane.f32.xlu0 %v1136
        %v1139 = vpop.xlane.xlu0 %1138
        %1140 = vadd.xlane.f32.xlu0 %v1137
        %v1141 = vpop.xlane.xlu0 %1140
        %v1143 = vlaneseq
        %v1144 = vshrl.u32 %v1143, 7
        %v1145 = vsub.s32 0, %v1144
        %v1146 = vrot.slane %v988, %v1145
        %v1148 = vadd.f32 %v1139, %v1146
        %v1149 = vadd.f32 %v1141, %v1146
        %v1150 = vmul.f32 %v1128, %v1134
        %v1151 = vmul.f32 %v1129, %v1134
        %1152 = vadd.xlane.f32.xlu0 %v1150
        %v1153 = vpop.xlane.xlu0 %1152
        %1154 = vadd.xlane.f32.xlu0 %v1151
        %v1155 = vpop.xlane.xlu0 %1154
        %v1156 = vadd.f32 %v1153, %v1146
        %v1157 = vadd.f32 %v1155, %v1146
        %v1158 = vmax.f32 %v1148, %v1156
        %v1159 = vmax.f32 %v1149, %v1157
        %v1160 = vsub.f32 %v1148, %v1158
        %v1161 = vsub.f32 %v1149, %v1159
        %v1162 = vmul.f32 %v1160, 1.442695
        %v1163 = vpow.pop %v1162
        %v1164 = vmul.f32 %v1161, 1.442695
        %v1165 = vpow.pop %v1164
        %v1166 = vsub.f32 %v1156, %v1158
        %v1167 = vsub.f32 %v1157, %v1159
        %v1168 = vmul.f32 %v1166, 1.442695
        %v1169 = vpow.pop %v1168
        %v1170 = vmul.f32 %v1167, 1.442695
        %v1171 = vpow.pop %v1170
        %v1172 = vadd.f32 %v1163, %v1169
        %v1173 = vadd.f32 %v1165, %v1171
        %v1174 = vrcp.pop %v1172
        %v1175 = vmul.f32 %v1163, %v1174
        %v1176 = vrcp.pop %v1173
        %v1177 = vmul.f32 %v1165, %v1176
        %v1178 = vmul.f32 %v1169, %v1174
        %v1179 = vmul.f32 %v1171, %v1176
        %1181 = vset.pattern.permute.xlu0 0
        %1182 = vperm.xlu0 %1181, %v1175
        %v1183 = vpop.permute.xlu0 %1182
        %1186 = vset.pattern.permute.xlu0 0
        %1187 = vperm.xlu0 %1186, %v1177
        %v1188 = vpop.permute.xlu0 %1187
        %v1190 = vmul.f32 %v1183, %v489
        %v1191 = vmul.f32 %v1188, %v490
        %1193 = vset.pattern.permute.xlu0 0
        %1194 = vperm.xlu0 %1193, %v1178
        %v1195 = vpop.permute.xlu0 %1194
        %1198 = vset.pattern.permute.xlu0 0
        %1199 = vperm.xlu0 %1198, %v1179
        %v1200 = vpop.permute.xlu0 %1199
        %v1202 = vmul.f32 %v1195, %v939
        %v1203 = vmul.f32 %v1200, %v940
        %v1204 = vadd.f32 %v1190, %v1202
        %v1205 = vadd.f32 %v1191, %v1203
        %1206 = vst [vmem:[#allocation2] sm:$0xff] %v1204
        %1207 = vst [vmem:[#allocation2 + $0x8] sm:$0xff] %v1205
        %1208 = vst [vmem:[%s472] sm:$0xff] %v1204
        %1209 = vst [vmem:[%s472 + $0x8] sm:$0xff] %v1205
        %1210 = vst [vmem:[%s479] sm:$0xff] %v969
        %s1211 = sand.u32 %s266, 1
        %s1212 = scalar_lea.sflag [#allocation8], %s1211
        %s1213 = sand.u32 %s266, 1
        %s1214 = smul.addr %s1213, 16
        %s1215 = scalar_lea.vmem [#allocation15], %s1214
        %s1216 = sand.u32 %s292, 1
        %s1217 = scalar_lea.sflag [#allocation17], %s1216
        %s1218 = sand.u32 %s292, 1
        %s1219 = smul.addr %s1218, 8
        %s1220 = scalar_lea.vmem [#allocation16], %s1219
        // Predicated region
        $region85: #{tpu_custom_call.1} parent=59 // pred_check
          %p1221 = pneg %p276
        $region86: #{tpu_custom_call.1} parent=59 // pred_check_branch
          %1223 = sbr.rel (%p1221) target = $region88
        $region87: #{tpu_custom_call.1} parent=59 // pred_region
          %s1225 = ssub.s32 256, 256
          %1226 = vsyncadd %s1212, %s1225
          %s1227 = smul.addr %s43, 2
          %s1228 = smul.addr %s1227, 128
          %s1229 = scalar_lea.hbm %s11, %s1228
          %s1230 = sshll.u32 %s1215, 4
          %s1231 = int_to_ptr.vmem [resolvable:$true] %s1230
          %1236 = dma.vmem_to_hbm [thread:$0]  %s1231, 256, %s1229, %s1212, 128, 128, 8
        $region88: #{tpu_custom_call.1} parent=59 // pred_fallthru
          _
        // Predicated region
        $region89: #{tpu_custom_call.1} parent=59 // pred_check
          %p1237 = pneg %p302
        $region90: #{tpu_custom_call.1} parent=59 // pred_check_branch
          %1239 = sbr.rel (%p1237) target = $region92
        $region91: #{tpu_custom_call.1} parent=59 // pred_region
          %s1241 = ssub.s32 128, 128
          %1242 = vsyncadd %s1217, %s1241
          %s1243 = smul.addr %s43, 128
          %s1244 = scalar_lea.hbm %s12, %s1243
          %s1246 = sshll.u32 %s1220, 4
          %s1247 = int_to_ptr.vmem [resolvable:$true] %s1246
          %1249 = dma.vmem_to_hbm [thread:$0]  %s1247, 128, %s1244, %s1217
        $region92: #{tpu_custom_call.1} parent=59 // pred_fallthru
          _
      $region60: #{tpu_custom_call.1} parent=5 // pred_fallthru
        _
      %p1250 = scmp.le.s32.totalorder 2, %s38
      // Predicated region
      $region93: #{tpu_custom_call.1} parent=5 // pred_check
        %p1251 = pneg %p1250
      $region94: #{tpu_custom_call.1} parent=5 // pred_check_branch
        %1253 = sbr.rel (%p1251) target = $region96
      $region95: #{tpu_custom_call.1} parent=5 // pred_region
        %s1254 = ssub.s32 %s38, 2
        // Predicated region
        $region97: #{tpu_custom_call.1} parent=95 // pred_check
          %p1255 = pneg %p282
        $region98: #{tpu_custom_call.1} parent=95 // pred_check_branch
          %1257 = sbr.rel (%p1255) target = $region100
        $region99: #{tpu_custom_call.1} parent=95 // pred_region
          %s1258 = sand.u32 %s267, 1
          %s1259 = scalar_lea.sflag [#allocation8], %s1258
          %s1260 = sand.u32 %s267, 1
          %s1261 = smul.addr %s1260, 16
          %s1262 = scalar_lea.vmem [#allocation15], %s1261
          %1263 = dma.done %s1259, 256
        $region100: #{tpu_custom_call.1} parent=95 // pred_fallthru
          _
        // Predicated region
        $region101: #{tpu_custom_call.1} parent=95 // pred_check
          %p1264 = pneg %p308
        $region102: #{tpu_custom_call.1} parent=95 // pred_check_branch
          %1266 = sbr.rel (%p1264) target = $region104
        $region103: #{tpu_custom_call.1} parent=95 // pred_region
          %s1267 = sand.u32 %s293, 1
          %s1268 = scalar_lea.sflag [#allocation17], %s1267
          %s1269 = sand.u32 %s293, 1
          %s1270 = smul.addr %s1269, 8
          %s1271 = scalar_lea.vmem [#allocation16], %s1270
          %1272 = dma.done %s1268, 128
        $region104: #{tpu_custom_call.1} parent=95 // pred_fallthru
          _
      $region96: #{tpu_custom_call.1} parent=5 // pred_fallthru
        _
    $region6: #{tpu_custom_call.1} parent=1 // loop_footer
      %s42 = sadd.s32 1, %s38
    $region7: #{tpu_custom_call.1} parent=1 // loop_footer_branch
      %37 = sbr.rel target = $region3
    $region8: #{tpu_custom_call.1} parent=1 // loop_exit
      _
    %1273 = vsyncpa [#allocation7], 1
    %s1274 = scalar_lea.sflag [#allocation7], 1
    %1275 = vsyncpa %s1274, 1
    %1276 = vsyncpa [#allocation10], 1
    %s1277 = scalar_lea.sflag [#allocation10], 1
    %1278 = vsyncpa %s1277, 1
    %1279 = vsyncpa [#allocation13], 1
    %1280 = vsyncpa [#allocation8], 1
    %s1281 = scalar_lea.sflag [#allocation8], 1
    %1282 = vsyncpa %s1281, 1
    %1283 = vsyncpa [#allocation17], 1
    %s1284 = scalar_lea.sflag [#allocation17], 1
    %1285 = vsyncpa %s1284, 1

</llo_original>
